<compile_context>
chip_gen: v7x
topology: tpu7x:2x2x1
jax: 0.10.0
libtpu: 0.0.40
codegen_flags: <defaults>
</compile_context>

<pallas_src>
import functools
import math

import jax
import jax.numpy as jnp
from jax.experimental import pallas as pl
from jax.experimental.pallas import tpu as pltpu


def _round_up(a: int, b: int) -> int:
    return (a + b - 1) // b * b


# ---------------------------------------------------------------------------
# Kernel 1: k/v projection + online softmax over spatial + context accumulation
# ---------------------------------------------------------------------------
def _context_kernel(x_ref, w_k_ref, w_v_ref, ctx_ref,
                    m_ref, l_ref, acc_ref,
                    *, heads, dim_head, hw_valid, tile, scale, need_mask):
    t = pl.program_id(1)

    @pl.when(t == 0)
    def _init():
        m_ref[...] = jnp.full(m_ref.shape, -jnp.inf, jnp.float32)
        l_ref[...] = jnp.zeros(l_ref.shape, jnp.float32)
        acc_ref[...] = jnp.zeros(acc_ref.shape, jnp.float32)

    x = x_ref[0].astype(jnp.float32)                        # (C, T)
    k = jnp.dot(w_k_ref[...].astype(jnp.float32), x,
                preferred_element_type=jnp.float32)          # (hidden, T)
    v = jnp.dot(w_v_ref[...].astype(jnp.float32), x,
                preferred_element_type=jnp.float32)          # (hidden, T)

    if need_mask:
        col = t * tile + jax.lax.broadcasted_iota(jnp.int32, (1, tile), 1)
        k = jnp.where(col < hw_valid, k, -jnp.inf)           # padded cols -> 0 weight

    # Online softmax over the spatial (lane) axis, per (head, d) row.
    m_prev = m_ref[...]                                      # (hidden, 1)
    m_new = jnp.maximum(m_prev, jnp.max(k, axis=1, keepdims=True))
    alpha = jnp.exp(m_prev - m_new)                          # (hidden, 1)
    p = jnp.exp(k - m_new)                                   # (hidden, T)
    l_ref[...] = alpha * l_ref[...] + jnp.sum(p, axis=1, keepdims=True)
    m_ref[...] = m_new

    p3 = p.reshape(heads, dim_head, tile)
    v3 = v.reshape(heads, dim_head, tile)
    ctx_tile = jnp.einsum('hdn,hen->hde', p3, v3,
                          preferred_element_type=jnp.float32)  # (h, d, e)
    acc_ref[...] = alpha.reshape(heads, dim_head, 1) * acc_ref[...] + ctx_tile

    @pl.when(t == pl.num_programs(1) - 1)
    def _finish():
        # Normalize softmax and fold in the q-scale (cheap: (hidden,1) sized).
        inv = (scale / l_ref[...]).reshape(heads, dim_head, 1)
        ctx_ref[0] = acc_ref[...] * inv


# ---------------------------------------------------------------------------
# Kernel 2: q projection + context application + fused to_out (1x1 conv + bias)
# ---------------------------------------------------------------------------
def _output_kernel(x_ref, w_q_ref, ctx_ref, w_out_ref, b_ref, o_ref,
                   *, heads, dim_head, tile):
    hidden = heads * dim_head
    x = x_ref[0].astype(jnp.float32)                         # (C, T)
    q = jnp.dot(w_q_ref[...].astype(jnp.float32), x,
                preferred_element_type=jnp.float32)           # (hidden, T)
    q3 = q.reshape(heads, dim_head, tile)
    ctx = ctx_ref[0]                                          # (h, d, e), already * scale
    att = jnp.einsum('hde,hdn->hen', ctx, q3,
                     preferred_element_type=jnp.float32)      # (h, e, T)
    att = att.reshape(hidden, tile)
    y = jnp.dot(w_out_ref[...].astype(jnp.float32), att,
                preferred_element_type=jnp.float32)
    y = y + b_ref[...].astype(jnp.float32)                    # (C, T) + (C, 1)
    o_ref[0] = y.astype(o_ref.dtype)


# ---------------------------------------------------------------------------
# Wrapper
# ---------------------------------------------------------------------------
def linear_attention(x, w_qkv, w_out, b_out, *, heads=4, dim_head=32,
                     lane_tile=2048, vmem_limit_bytes=32 * 1024 * 1024):
    """x: (N, C, H, W); w_qkv: (3*heads*dim_head, C) (1x1 conv, no bias);
    w_out: (C, heads*dim_head); b_out: (C,). Returns (N, C, H, W)."""
    N, C, H, W = x.shape
    hidden = heads * dim_head
    assert w_qkv.shape == (3 * hidden, C)
    assert w_out.shape == (C, hidden)
    assert b_out.shape == (C,)
    assert lane_tile % 128 == 0

    scale = dim_head ** -0.5
    HW = H * W
    T = min(lane_tile, _round_up(HW, 128))      # lane tile, multiple of 128
    HW_pad = _round_up(HW, T)
    num_t = HW_pad // T
    need_mask = HW_pad != HW

    x3 = x.reshape(N, C, HW)
    if need_mask:
        x3 = jnp.pad(x3, ((0, 0), (0, 0), (0, HW_pad - HW)))

    w_q = w_qkv[:hidden]
    w_k = w_qkv[hidden:2 * hidden]
    w_v = w_qkv[2 * hidden:]
    b2 = b_out.reshape(C, 1)

    # ---- Pass 1: per-(batch, head) context matrices (heads, d, d) ----------
    ctx = pl.pallas_call(
        functools.partial(_context_kernel, heads=heads, dim_head=dim_head,
                          hw_valid=HW, tile=T, scale=scale, need_mask=need_mask),
        out_shape=jax.ShapeDtypeStruct((N, heads, dim_head, dim_head), jnp.float32),
        grid_spec=pltpu.PrefetchScalarGridSpec(
            num_scalar_prefetch=0,
            grid=(N, num_t),
            in_specs=[
                pl.BlockSpec((1, C, T), lambda n, t: (n, 0, t)),
                pl.BlockSpec((hidden, C), lambda n, t: (0, 0)),
                pl.BlockSpec((hidden, C), lambda n, t: (0, 0)),
            ],
            out_specs=pl.BlockSpec((1, heads, dim_head, dim_head),
                                   lambda n, t: (n, 0, 0, 0)),
            scratch_shapes=[
                pltpu.VMEM((hidden, 1), jnp.float32),            # running max
                pltpu.VMEM((hidden, 1), jnp.float32),            # running sum
                pltpu.VMEM((heads, dim_head, dim_head), jnp.float32),  # context acc
            ],
        ),
        compiler_params=pltpu.CompilerParams(
            dimension_semantics=("parallel", "arbitrary"),
            vmem_limit_bytes=vmem_limit_bytes,
        ),
    )(x3, w_k, w_v)

    # ---- Pass 2: q projection + context apply + to_out projection ----------
    out3 = pl.pallas_call(
        functools.partial(_output_kernel, heads=heads, dim_head=dim_head, tile=T),
        out_shape=jax.ShapeDtypeStruct((N, C, HW_pad), x.dtype),
        grid_spec=pltpu.PrefetchScalarGridSpec(
            num_scalar_prefetch=0,
            grid=(N, num_t),
            in_specs=[
                pl.BlockSpec((1, C, T), lambda n, t: (n, 0, t)),
                pl.BlockSpec((hidden, C), lambda n, t: (0, 0)),
                pl.BlockSpec((1, heads, dim_head, dim_head),
                             lambda n, t: (n, 0, 0, 0)),
                pl.BlockSpec((C, hidden), lambda n, t: (0, 0)),
                pl.BlockSpec((C, 1), lambda n, t: (0, 0)),
            ],
            out_specs=pl.BlockSpec((1, C, T), lambda n, t: (n, 0, t)),
        ),
        compiler_params=pltpu.CompilerParams(
            dimension_semantics=("parallel", "parallel"),
            vmem_limit_bytes=vmem_limit_bytes,
        ),
    )(x3, w_q, ctx, w_out, b2)

    return out3[:, :, :HW].reshape(N, C, H, W)


# ---------------------------------------------------------------------------
# Pure-JAX reference matching the PyTorch forward
# ---------------------------------------------------------------------------
def linear_attention_ref(x, w_qkv, w_out, b_out, *, heads, dim_head):
    N, C, H, W = x.shape
    hidden = heads * dim_head
    scale = dim_head ** -0.5
    hp = jax.lax.Precision.HIGHEST
    x3 = x.reshape(N, C, H * W)
    qkv = jnp.einsum('oc,ncs->nos', w_qkv, x3, precision=hp)
    q, k, v = jnp.split(qkv, 3, axis=1)
    q = q.reshape(N, heads, dim_head, H * W) * scale
    k = k.reshape(N, heads, dim_head, H * W)
    v = v.reshape(N, heads, dim_head, H * W)
    k = jax.nn.softmax(k, axis=-1)
    context = jnp.einsum('nhds,nhes->nhde', k, v, precision=hp)
    out = jnp.einsum('nhde,nhds->nhes', context, q, precision=hp)
    out = out.reshape(N, hidden, H * W)
    y = jnp.einsum('oc,ncs->nos', w_out, out, precision=hp) + b_out.reshape(1, C, 1)
    return y.reshape(N, C, H, W)


if __name__ == "__main__":
    key = jax.random.PRNGKey(0)
    k1, k2, k3, k4 = jax.random.split(key, 4)

    N, dim, H, W = 2, 4, 16, 16
    heads, dim_head = 4, 32
    hidden = heads * dim_head

    x = jax.random.normal(k1, (N, dim, H, W), dtype=jnp.float32)
    # 1x1 conv weights (PyTorch layout (out, in, 1, 1) collapsed to (out, in)),
    # scaled ~1/sqrt(fan_in) to keep magnitudes O(1).
    w_qkv = jax.random.normal(k2, (3 * hidden, dim), dtype=jnp.float32) / math.sqrt(dim)
    w_out = jax.random.normal(k3, (dim, hidden), dtype=jnp.float32) / math.sqrt(hidden)
    b_out = jax.random.normal(k4, (dim,), dtype=jnp.float32)

    out = linear_attention(x, w_qkv, w_out, b_out, heads=heads, dim_head=dim_head)
    out = jax.block_until_ready(out)

    ref = linear_attention_ref(x, w_qkv, w_out, b_out, heads=heads, dim_head=dim_head)
    assert out.shape == (N, dim, H, W)
    assert jnp.allclose(out, ref, atol=2e-2, rtol=2e-2), (
        f"max abs err {jnp.max(jnp.abs(out - ref))}")

    print("KERNEL_OK")
</pallas_src>

<mosaic_0001>
module attributes {stable_mosaic.version = 11 : i64} {
  func.func @_context_kernel(%arg0: i32, %arg1: i32, %arg2: memref<1x4x256xf32, #tpu.memory_space<vmem>>, %arg3: memref<128x4xf32, #tpu.memory_space<vmem>>, %arg4: memref<128x4xf32, #tpu.memory_space<vmem>>, %arg5: memref<1x4x32x32xf32, #tpu.memory_space<vmem>>, %arg6: memref<128x1xf32, #tpu.memory_space<vmem>>, %arg7: memref<128x1xf32, #tpu.memory_space<vmem>>, %arg8: memref<4x32x32xf32, #tpu.memory_space<vmem>>) attributes {dimension_semantics = [#tpu.dimension_semantics<parallel>, #tpu.dimension_semantics<arbitrary>], iteration_bounds = array<i64: 2, 1>, scalar_prefetch = 0 : i64, scratch_operands = 3 : i64, tpu.core_type = #tpu.core_type<tc>, window_params = [{transform_indices = @transform_0, window_bounds = array<i64: 1, 4, 256>}, {pipeline_mode = #tpu.pipeline_mode<synchronous>, transform_indices = @transform_1, window_bounds = array<i64: 128, 4>}, {pipeline_mode = #tpu.pipeline_mode<synchronous>, transform_indices = @transform_2, window_bounds = array<i64: 128, 4>}, {transform_indices = @transform_3, window_bounds = array<i64: 1, 4, 32, 32>}]} {
    %c0_i32 = arith.constant 0 : i32
    %0 = arith.cmpi eq, %arg1, %c0_i32 : i32
    %1 = arith.extui %0 : i1 to i32
    %c0_i32_0 = arith.constant 0 : i32
    %2 = arith.cmpi ne, %1, %c0_i32_0 : i32
    scf.if %2 {
      %cst_27 = arith.constant 0xFF800000 : f32
      %37 = vector.broadcast %cst_27 : f32 to vector<128x1xf32>
      %c0_28 = arith.constant 0 : index
      %c0_29 = arith.constant 0 : index
      %38 = vector.load %arg6[%c0_28, %c0_29] : memref<128x1xf32, #tpu.memory_space<vmem>>, vector<128x1xf32>
      tpu.vector_store %arg6[%c0_28, %c0_29], %37 {strides = array<i32>} : memref<128x1xf32, #tpu.memory_space<vmem>>, vector<128x1xf32>,
      %cst_30 = arith.constant 0.000000e+00 : f32
      %39 = vector.broadcast %cst_30 : f32 to vector<128x1xf32>
      %c0_31 = arith.constant 0 : index
      %c0_32 = arith.constant 0 : index
      %40 = vector.load %arg7[%c0_31, %c0_32] : memref<128x1xf32, #tpu.memory_space<vmem>>, vector<128x1xf32>
      tpu.vector_store %arg7[%c0_31, %c0_32], %39 {strides = array<i32>} : memref<128x1xf32, #tpu.memory_space<vmem>>, vector<128x1xf32>,
      %cst_33 = arith.constant 0.000000e+00 : f32
      %41 = vector.broadcast %cst_33 : f32 to vector<4x32x32xf32>
      %c0_34 = arith.constant 0 : index
      %c0_35 = arith.constant 0 : index
      %c0_36 = arith.constant 0 : index
      %42 = vector.load %arg8[%c0_34, %c0_35, %c0_36] : memref<4x32x32xf32, #tpu.memory_space<vmem>>, vector<4x32x32xf32>
      tpu.vector_store %arg8[%c0_34, %c0_35, %c0_36], %41 {strides = array<i32>} : memref<4x32x32xf32, #tpu.memory_space<vmem>>, vector<4x32x32xf32>,
    } else {
    }
    %c0 = arith.constant 0 : index
    %c0_1 = arith.constant 0 : index
    %c0_2 = arith.constant 0 : index
    %3 = vector.load %arg2[%c0, %c0_1, %c0_2] : memref<1x4x256xf32, #tpu.memory_space<vmem>>, vector<1x4x256xf32>
    %4 = vector.shape_cast %3 : vector<1x4x256xf32> to vector<4x256xf32>
    %c0_3 = arith.constant 0 : index
    %c0_4 = arith.constant 0 : index
    %5 = vector.load %arg3[%c0_3, %c0_4] : memref<128x4xf32, #tpu.memory_space<vmem>>, vector<128x4xf32>
    %cst = arith.constant dense<0.000000e+00> : vector<128x256xf32>
    %6 = tpu.matmul %5, %4, %cst {dimension_numbers = #tpu.dot_dimension_numbers<[1], [0], [0], [1], [0, 0, 1, 1], [], []>} : vector<128x4xf32>, vector<4x256xf32>, vector<128x256xf32> -> vector<128x256xf32>
    %c0_5 = arith.constant 0 : index
    %c0_6 = arith.constant 0 : index
    %7 = vector.load %arg4[%c0_5, %c0_6] : memref<128x4xf32, #tpu.memory_space<vmem>>, vector<128x4xf32>
    %cst_7 = arith.constant dense<0.000000e+00> : vector<128x256xf32>
    %8 = tpu.matmul %7, %4, %cst_7 {dimension_numbers = #tpu.dot_dimension_numbers<[1], [0], [0], [1], [0, 0, 1, 1], [], []>} : vector<128x4xf32>, vector<4x256xf32>, vector<128x256xf32> -> vector<128x256xf32>
    %c0_8 = arith.constant 0 : index
    %c0_9 = arith.constant 0 : index
    %9 = vector.load %arg6[%c0_8, %c0_9] : memref<128x1xf32, #tpu.memory_space<vmem>>, vector<128x1xf32>
    %cst_10 = arith.constant dense<0xFF800000> : vector<128xf32>
    %10 = vector.multi_reduction <maximumf>, %6, %cst_10 [1] : vector<128x256xf32> to vector<128xf32>
    %11 = vector.shape_cast %10 : vector<128xf32> to vector<128x1xf32>
    %12 = arith.maximumf %9, %11 : vector<128x1xf32>
    %13 = arith.subf %9, %12 : vector<128x1xf32>
    %14 = math.exp %13 : vector<128x1xf32>
    %15 = vector.broadcast %12 : vector<128x1xf32> to vector<128x256xf32>
    %16 = arith.subf %6, %15 : vector<128x256xf32>
    %17 = math.exp %16 : vector<128x256xf32>
    %c0_11 = arith.constant 0 : index
    %c0_12 = arith.constant 0 : index
    %18 = vector.load %arg7[%c0_11, %c0_12] : memref<128x1xf32, #tpu.memory_space<vmem>>, vector<128x1xf32>
    %19 = arith.mulf %14, %18 : vector<128x1xf32>
    %cst_13 = arith.constant dense<0.000000e+00> : vector<128xf32>
    %20 = vector.multi_reduction <add>, %17, %cst_13 [1] : vector<128x256xf32> to vector<128xf32>
    %21 = vector.shape_cast %20 : vector<128xf32> to vector<128x1xf32>
    %22 = arith.addf %19, %21 : vector<128x1xf32>
    %c0_14 = arith.constant 0 : index
    %c0_15 = arith.constant 0 : index
    %23 = vector.load %arg7[%c0_14, %c0_15] : memref<128x1xf32, #tpu.memory_space<vmem>>, vector<128x1xf32>
    tpu.vector_store %arg7[%c0_14, %c0_15], %22 {strides = array<i32>} : memref<128x1xf32, #tpu.memory_space<vmem>>, vector<128x1xf32>,
    %c0_16 = arith.constant 0 : index
    %c0_17 = arith.constant 0 : index
    %24 = vector.load %arg6[%c0_16, %c0_17] : memref<128x1xf32, #tpu.memory_space<vmem>>, vector<128x1xf32>
    tpu.vector_store %arg6[%c0_16, %c0_17], %12 {strides = array<i32>} : memref<128x1xf32, #tpu.memory_space<vmem>>, vector<128x1xf32>,
    %25 = vector.shape_cast %17 : vector<128x256xf32> to vector<4x32x256xf32>
    %26 = vector.shape_cast %8 : vector<128x256xf32> to vector<4x32x256xf32>
    "tpu.trace_start"() <{level = 10 : i32, message = "hdn,hen->hde"}> : () -> ()
    %cst_18 = arith.constant dense<0.000000e+00> : vector<4x32x32xf32>
    %27 = tpu.matmul %25, %26, %cst_18 {dimension_numbers = #tpu.dot_dimension_numbers<[2], [2], [1], [1], [0, 0, 0, 1, 1, 1], [0], [0]>} : vector<4x32x256xf32>, vector<4x32x256xf32>, vector<4x32x32xf32> -> vector<4x32x32xf32>
    "tpu.trace_stop"() : () -> ()
    %28 = vector.shape_cast %14 : vector<128x1xf32> to vector<4x32x1xf32>
    %c0_19 = arith.constant 0 : index
    %c0_20 = arith.constant 0 : index
    %c0_21 = arith.constant 0 : index
    %29 = vector.load %arg8[%c0_19, %c0_20, %c0_21] : memref<4x32x32xf32, #tpu.memory_space<vmem>>, vector<4x32x32xf32>
    %30 = vector.broadcast %28 : vector<4x32x1xf32> to vector<4x32x32xf32>
    %31 = arith.mulf %30, %29 : vector<4x32x32xf32>
    %32 = arith.addf %31, %27 : vector<4x32x32xf32>
    %c0_22 = arith.constant 0 : index
    %c0_23 = arith.constant 0 : index
    %c0_24 = arith.constant 0 : index
    %33 = vector.load %arg8[%c0_22, %c0_23, %c0_24] : memref<4x32x32xf32, #tpu.memory_space<vmem>>, vector<4x32x32xf32>
    tpu.vector_store %arg8[%c0_22, %c0_23, %c0_24], %32 {strides = array<i32>} : memref<4x32x32xf32, #tpu.memory_space<vmem>>, vector<4x32x32xf32>,
    %c0_i32_25 = arith.constant 0 : i32
    %34 = arith.cmpi eq, %arg1, %c0_i32_25 : i32
    %35 = arith.extui %34 : i1 to i32
    %c0_i32_26 = arith.constant 0 : i32
    %36 = arith.cmpi ne, %35, %c0_i32_26 : i32
    scf.if %36 {
      %c0_27 = arith.constant 0 : index
      %c0_28 = arith.constant 0 : index
      %37 = vector.load %arg7[%c0_27, %c0_28] : memref<128x1xf32, #tpu.memory_space<vmem>>, vector<128x1xf32>
      %cst_29 = arith.constant 0.176776692 : f32
      %38 = vector.broadcast %cst_29 : f32 to vector<128x1xf32>
      %39 = arith.divf %38, %37 : vector<128x1xf32>
      %40 = vector.shape_cast %39 : vector<128x1xf32> to vector<4x32x1xf32>
      %c0_30 = arith.constant 0 : index
      %c0_31 = arith.constant 0 : index
      %c0_32 = arith.constant 0 : index
      %41 = vector.load %arg8[%c0_30, %c0_31, %c0_32] : memref<4x32x32xf32, #tpu.memory_space<vmem>>, vector<4x32x32xf32>
      %42 = vector.broadcast %40 : vector<4x32x1xf32> to vector<4x32x32xf32>
      %43 = arith.mulf %41, %42 : vector<4x32x32xf32>
      %c0_33 = arith.constant 0 : index
      %c0_34 = arith.constant 0 : index
      %c0_35 = arith.constant 0 : index
      %c0_36 = arith.constant 0 : index
      %44 = vector.load %arg5[%c0_33, %c0_34, %c0_35, %c0_36] : memref<1x4x32x32xf32, #tpu.memory_space<vmem>>, vector<1x4x32x32xf32>
      %45 = vector.shape_cast %44 : vector<1x4x32x32xf32> to vector<4x32x32xf32>
      %46 = vector.shape_cast %43 : vector<4x32x32xf32> to vector<1x4x32x32xf32>
      tpu.vector_store %arg5[%c0_33, %c0_34, %c0_35, %c0_36], %46 {strides = array<i32>} : memref<1x4x32x32xf32, #tpu.memory_space<vmem>>, vector<1x4x32x32xf32>,
    } else {
    }
    return
  }
  func.func @transform_0(%arg0: i32, %arg1: i32) -> (i32, i32, i32) {
    %c0_i32 = arith.constant 0 : i32
    %c0_i32_0 = arith.constant 0 : i32
    return %arg0, %c0_i32, %arg1 : i32, i32, i32
  }
  func.func @transform_1(%arg0: i32, %arg1: i32) -> (i32, i32) {
    %c0_i32 = arith.constant 0 : i32
    %c0_i32_0 = arith.constant 0 : i32
    %c0_i32_1 = arith.constant 0 : i32
    return %c0_i32, %c0_i32_0 : i32, i32
  }
  func.func @transform_2(%arg0: i32, %arg1: i32) -> (i32, i32) {
    %c0_i32 = arith.constant 0 : i32
    %c0_i32_0 = arith.constant 0 : i32
    %c0_i32_1 = arith.constant 0 : i32
    return %c0_i32, %c0_i32_0 : i32, i32
  }
  func.func @transform_3(%arg0: i32, %arg1: i32) -> (i32, i32, i32, i32) {
    %c0_i32 = arith.constant 0 : i32
    %c0_i32_0 = arith.constant 0 : i32
    %c0_i32_1 = arith.constant 0 : i32
    %c0_i32_2 = arith.constant 0 : i32
    return %arg0, %c0_i32, %c0_i32_0, %c0_i32_1 : i32, i32, i32, i32
  }
}

</mosaic_0001>

<llo_original>
// kernel: tpu_custom_call.1
$region0: #{tpu_custom_call.1}
  #allocation0 [shape = 'u32[]', space=smem, size = 0x4, offset = 0x4, fixed_abs, tag = 'smem constant byte address 0x4 - core index']
  #allocation1 [shape = 'u32[144,128]{1,0:T(1,128)}', space=vmem, size = 0x12000, scoped, tag = 'internal scratch']
  #allocation2 [shape = 'f32[128,1]{1,0:T(8,128)}', space=vmem, size = 0x10000, scoped, tag = 'scratch operand']
  #allocation3 [shape = 'f32[128,1]{1,0:T(8,128)}', space=vmem, size = 0x10000, scoped, tag = 'scratch operand']
  #allocation4 [shape = 'f32[4,32,32]{2,1,0:T(8,128)}', space=vmem, size = 0x10000, scoped, tag = 'scratch operand']
  %s0 = inlined_call_operand.vmem [shape: f32[2,4,256], index: 0, kind: input, shape index: {}]
  %s1 = inlined_call_operand.vmem [shape: f32[128,4], index: 1, kind: input, shape index: {}]
  %s2 = inlined_call_operand.vmem [shape: f32[128,4], index: 2, kind: input, shape index: {}]
  %s3 = inlined_call_operand.hbm [shape: f32[2,4,32,32], index: 3, kind: output, shape index: {}]
  %s4 = sld [smem:[#allocation0]]
  $region53: #{tpu_custom_call.1} parent=0
    _
  %s6 = ssub.s32 1, %s4
  %s7 = scalar_select 0, %s6, %s4
  $region1: #{tpu_custom_call.1} parent=0
    #allocation5 [shape = 'u8[131072]{0}', space=vmem, size = 0x20000, scoped, tag = 'output window, operand 0']
    #allocation6 [shape = 's32[2]{0}', space=sflag, size = 0x8, scoped, tag = 'scoped memory for tpu_custom_call.1']
    %8 = vsyncpa [#allocation6], 0
    %s9 = scalar_lea.sflag [#allocation6], 1
    %10 = vsyncpa %s9, 0
    loop: start=0, step=1, limit=4
    $region2: #{tpu_custom_call.1} parent=1 // loop_pre_header
      _
    $region3: #{tpu_custom_call.1} parent=1 // loop_header
      %s12 = sphi 0, %s16
      %p13 = scmp.ge.s32.totalorder %s12, 4
      %s19 = sphi 0, %s31
      %s20 = sphi 0, %s27
      %s21 = sphi 0, %s19
      %s22 = sphi 0, %s20
      %s23 = sphi 0, %s21
      %s24 = sphi 0, %s22
      %s36 = sphi 0, %s38
      %s39 = sphi 0, %s36
      %s40 = sphi 0, %s39
      %s56 = sphi 0, %s40
      %s60 = sphi 0, %s60
      %s62 = sphi 0, %s60
      %s63 = sphi 0, %s62
      %s77 = sphi 0, %s63
      %s81 = sphi 0, %s81
      %s83 = sphi 0, %s81
      %s84 = sphi 0, %s83
      %s98 = sphi 0, %s84
      %s104 = sphi 0, %s106
      %s107 = sphi 0, %s104
      %s108 = sphi 0, %s107
      %s124 = sphi 0, %s108
    $region4: #{tpu_custom_call.1} parent=1 // loop_header_branch
      %15 = sbr.rel (%p13) target = $region8
    $region5: #{tpu_custom_call.1} parent=1 // loop_body
      %s17 = ssub.s32 %s12, 1
      %s18 = ssub.s32 %s12, 2
      %s25 = sadd.s32 1, %s20
      %p26 = scmp.ge.s32.totalorder %s25, 1
      %s27 = scalar_select %p26, 0, %s25
      %s28 = sadd.s32 1, %s19
      %s29 = scalar_select %p26, %s28, %s19
      %p30 = scmp.ge.s32.totalorder %s29, 2
      %s31 = scalar_select %p30, 0, %s29
      %s32 = ssub.s32 %s19, %s31
      %s33 = ssub.s32 %s20, %s27
      %s34 = sor.u32 %s32, %s33
      %p35 = scmp.eq.s32.totalorder %s34, 0
      %s37 = sadd.s32 %s36, 1
      %s38 = scalar_select %p35, %s36, %s37
      %p41 = pneg %p35
      %p42 = scmp.eq.s32.totalorder %s12, 1
      %p43 = por %p41, %p42
      %p44 = scmp.ne.s32.totalorder %s36, %s39
      %p45 = scmp.eq.s32.totalorder %s12, 0
      %p46 = por %p44, %p45
      %p47 = scmp.ne.s32.totalorder %s36, %s39
      %p48 = scmp.eq.s32.totalorder %s17, 1
      %p49 = por %p47, %p48
      %p50 = scmp.ne.s32.totalorder %s39, %s40
      %p51 = scmp.eq.s32.totalorder %s17, 0
      %p52 = por %p50, %p51
      %p53 = scmp.ne.s32.totalorder %s39, %s40
      %p54 = scmp.eq.s32.totalorder %s18, 1
      %p55 = por %p53, %p54
      %p57 = scmp.ne.s32.totalorder %s40, %s56
      %p58 = scmp.eq.s32.totalorder %s18, 0
      %p59 = por %p57, %p58
      %s61 = sadd.s32 %s60, 1
      %p64 = scmp.eq.s32.totalorder %s12, 1
      %p65 = scmp.ne.s32.totalorder %s60, %s62
      %p66 = scmp.eq.s32.totalorder %s12, 0
      %p67 = por %p65, %p66
      %p68 = scmp.ne.s32.totalorder %s60, %s62
      %p69 = scmp.eq.s32.totalorder %s17, 1
      %p70 = por %p68, %p69
      %p71 = scmp.ne.s32.totalorder %s62, %s63
      %p72 = scmp.eq.s32.totalorder %s17, 0
      %p73 = por %p71, %p72
      %p74 = scmp.ne.s32.totalorder %s62, %s63
      %p75 = scmp.eq.s32.totalorder %s18, 1
      %p76 = por %p74, %p75
      %p78 = scmp.ne.s32.totalorder %s63, %s77
      %p79 = scmp.eq.s32.totalorder %s18, 0
      %p80 = por %p78, %p79
      %s82 = sadd.s32 %s81, 1
      %p85 = scmp.eq.s32.totalorder %s12, 1
      %p86 = scmp.ne.s32.totalorder %s81, %s83
      %p87 = scmp.eq.s32.totalorder %s12, 0
      %p88 = por %p86, %p87
      %p89 = scmp.ne.s32.totalorder %s81, %s83
      %p90 = scmp.eq.s32.totalorder %s17, 1
      %p91 = por %p89, %p90
      %p92 = scmp.ne.s32.totalorder %s83, %s84
      %p93 = scmp.eq.s32.totalorder %s17, 0
      %p94 = por %p92, %p93
      %p95 = scmp.ne.s32.totalorder %s83, %s84
      %p96 = scmp.eq.s32.totalorder %s18, 1
      %p97 = por %p95, %p96
      %p99 = scmp.ne.s32.totalorder %s84, %s98
      %p100 = scmp.eq.s32.totalorder %s18, 0
      %p101 = por %p99, %p100
      %s102 = ssub.s32 %s19, %s31
      %p103 = scmp.eq.s32.totalorder %s102, 0
      %s105 = sadd.s32 %s104, 1
      %s106 = scalar_select %p103, %s104, %s105
      %p109 = pneg %p103
      %p110 = scmp.eq.s32.totalorder %s12, 1
      %p111 = por %p109, %p110
      %p112 = scmp.ne.s32.totalorder %s104, %s107
      %p113 = scmp.eq.s32.totalorder %s12, 0
      %p114 = por %p112, %p113
      %p115 = scmp.ne.s32.totalorder %s104, %s107
      %p116 = scmp.eq.s32.totalorder %s17, 1
      %p117 = por %p115, %p116
      %p118 = scmp.ne.s32.totalorder %s107, %s108
      %p119 = scmp.eq.s32.totalorder %s17, 0
      %p120 = por %p118, %p119
      %p121 = scmp.ne.s32.totalorder %s107, %s108
      %p122 = scmp.eq.s32.totalorder %s18, 1
      %p123 = por %p121, %p122
      %p125 = scmp.ne.s32.totalorder %s108, %s124
      %p126 = scmp.eq.s32.totalorder %s18, 0
      %p127 = por %p125, %p126
      %p128 = scmp.le.s32.totalorder 1, %s12
      %p129 = scmp.lt.s32.totalorder %s12, 3
      %p130 = pnand %p128, %p129
      %p131 = pneg %p130
      // Predicated region
      $region9: #{tpu_custom_call.1} parent=5 // pred_check
        _
      $region10: #{tpu_custom_call.1} parent=5 // pred_check_branch
        %133 = sbr.rel (%p130) target = $region12
      $region11: #{tpu_custom_call.1} parent=5 // pred_region
        %s134 = ssub.s32 %s12, 1
        // Predicated region
        $region13: #{tpu_custom_call.1} parent=11 // pred_check
          %p135 = pneg %p73
        $region14: #{tpu_custom_call.1} parent=11 // pred_check_branch
          %137 = sbr.rel (%p135) target = $region16
        $region15: #{tpu_custom_call.1} parent=11 // pred_region
          _
        $region16: #{tpu_custom_call.1} parent=11 // pred_fallthru
          _
        // Predicated region
        $region17: #{tpu_custom_call.1} parent=11 // pred_check
          %p138 = pneg %p94
        $region18: #{tpu_custom_call.1} parent=11 // pred_check_branch
          %140 = sbr.rel (%p138) target = $region20
        $region19: #{tpu_custom_call.1} parent=11 // pred_region
          _
        $region20: #{tpu_custom_call.1} parent=11 // pred_fallthru
          _
      $region12: #{tpu_custom_call.1} parent=5 // pred_fallthru
        _
      %p141 = scmp.lt.s32.totalorder %s12, 2
      // Predicated region
      $region21: #{tpu_custom_call.1} parent=5 // pred_check
        %p142 = pneg %p141
      $region22: #{tpu_custom_call.1} parent=5 // pred_check_branch
        %144 = sbr.rel (%p142) target = $region24
      $region23: #{tpu_custom_call.1} parent=5 // pred_region
        // Predicated region
        $region25: #{tpu_custom_call.1} parent=23 // pred_check
          %p145 = pneg %p46
        $region26: #{tpu_custom_call.1} parent=23 // pred_check_branch
          %147 = sbr.rel (%p145) target = $region28
        $region27: #{tpu_custom_call.1} parent=23 // pred_region
          %s148 = smul.u32 2, %s20
          %p149 = scmp.lt.s32.totalorder %s19, 1
          %s150 = scalar_select %p149, %s19, 1
          %p151 = scmp.lt.s32.totalorder %s148, 1
          %s152 = scalar_select %p151, %s148, 1
          %s153 = smul.addr %s150, 2
          %s154 = sadd.s32 %s152, %s153
          %s155 = smul.addr %s154, 4
          %s156 = scalar_lea.vmem %s0, %s155
          %s157 = smul.u32 2, %s20
        $region28: #{tpu_custom_call.1} parent=23 // pred_fallthru
          _
      $region24: #{tpu_custom_call.1} parent=5 // pred_fallthru
        _
      %p158 = scmp.le.s32.totalorder 1, %s12
      %p159 = scmp.lt.s32.totalorder %s12, 3
      %p160 = pnand %p158, %p159
      %p161 = pneg %p160
      // Predicated region
      $region29: #{tpu_custom_call.1} parent=5 // pred_check
        _
      $region30: #{tpu_custom_call.1} parent=5 // pred_check_branch
        %163 = sbr.rel (%p160) target = $region32
      $region31: #{tpu_custom_call.1} parent=5 // pred_region
        %s164 = ssub.s32 %s12, 1
        %s165 = smul.u32 2, %s22
        %p166 = scmp.lt.s32.totalorder %s21, 1
        %s167 = scalar_select %p166, %s21, 1
        %p168 = scmp.lt.s32.totalorder %s165, 1
        %s169 = scalar_select %p168, %s165, 1
        %s170 = smul.addr %s167, 2
        %s171 = sadd.s32 %s169, %s170
        %s172 = smul.addr %s171, 4
        %s173 = scalar_lea.vmem %s0, %s172
        %p174 = pneg %p52
        %p175 = pneg %p49
        %p176 = pneg %p73
        %p177 = pneg %p70
        %p178 = pneg %p94
        %p179 = pneg %p91
        %p180 = pneg %p120
        %p181 = pneg %p117
        %s182 = sand.u32 %s107, 1
        %s183 = scalar_lea.sflag [#allocation6], %s182
        %s184 = sand.u32 %s107, 1
        %s185 = smul.addr %s184, 128
        %s186 = scalar_lea.vmem [#allocation5], %s185
        %s187 = smul.u32 2, %s22
        %p188 = scmp.lt.s32.totalorder %s21, 1
        %s189 = scalar_select %p188, %s21, 1
        %p190 = scmp.lt.s32.totalorder %s187, 1
        %s191 = scalar_select %p190, %s187, 1
        %s192 = smul.addr %s189, 2
        %s193 = sadd.s32 %s191, %s192
        %s194 = smul.addr %s193, 4
        %s195 = scalar_lea.vmem %s0, %s194
        %s196 = smul.u32 2, %s22
        %p197 = scmp.eq.s32.totalorder %s22, 0
        // Predicated region
        $region33: #{tpu_custom_call.1} parent=31 // pred_check
          %p198 = pneg %p197
        $region34: #{tpu_custom_call.1} parent=31 // pred_check_branch
          %200 = sbr.rel (%p198) target = $region36
        $region35: #{tpu_custom_call.1} parent=31 // pred_region
          %vm201 = vcmask 7168
          %202 = vst.msk [vmem:[#allocation2] sm:$0xff] %vm201, -inf
          %203 = vst.msk [vmem:[#allocation2 + $0x8] sm:$0xff] %vm201, -inf
          %204 = vst.msk [vmem:[#allocation2 + $0x10] sm:$0xff] %vm201, -inf
          %205 = vst.msk [vmem:[#allocation2 + $0x18] sm:$0xff] %vm201, -inf
          %206 = vst.msk [vmem:[#allocation2 + $0x20] sm:$0xff] %vm201, -inf
          %207 = vst.msk [vmem:[#allocation2 + $0x28] sm:$0xff] %vm201, -inf
          %208 = vst.msk [vmem:[#allocation2 + $0x30] sm:$0xff] %vm201, -inf
          %209 = vst.msk [vmem:[#allocation2 + $0x38] sm:$0xff] %vm201, -inf
          %210 = vst.msk [vmem:[#allocation2 + $0x40] sm:$0xff] %vm201, -inf
          %211 = vst.msk [vmem:[#allocation2 + $0x48] sm:$0xff] %vm201, -inf
          %212 = vst.msk [vmem:[#allocation2 + $0x50] sm:$0xff] %vm201, -inf
          %213 = vst.msk [vmem:[#allocation2 + $0x58] sm:$0xff] %vm201, -inf
          %214 = vst.msk [vmem:[#allocation2 + $0x60] sm:$0xff] %vm201, -inf
          %215 = vst.msk [vmem:[#allocation2 + $0x68] sm:$0xff] %vm201, -inf
          %216 = vst.msk [vmem:[#allocation2 + $0x70] sm:$0xff] %vm201, -inf
          %217 = vst.msk [vmem:[#allocation2 + $0x78] sm:$0xff] %vm201, -inf
          %218 = vst.msk [vmem:[#allocation3] sm:$0xff] %vm201, 0.0
          %219 = vst.msk [vmem:[#allocation3 + $0x8] sm:$0xff] %vm201, 0.0
          %220 = vst.msk [vmem:[#allocation3 + $0x10] sm:$0xff] %vm201, 0.0
          %221 = vst.msk [vmem:[#allocation3 + $0x18] sm:$0xff] %vm201, 0.0
          %222 = vst.msk [vmem:[#allocation3 + $0x20] sm:$0xff] %vm201, 0.0
          %223 = vst.msk [vmem:[#allocation3 + $0x28] sm:$0xff] %vm201, 0.0
          %224 = vst.msk [vmem:[#allocation3 + $0x30] sm:$0xff] %vm201, 0.0
          %225 = vst.msk [vmem:[#allocation3 + $0x38] sm:$0xff] %vm201, 0.0
          %226 = vst.msk [vmem:[#allocation3 + $0x40] sm:$0xff] %vm201, 0.0
          %227 = vst.msk [vmem:[#allocation3 + $0x48] sm:$0xff] %vm201, 0.0
          %228 = vst.msk [vmem:[#allocation3 + $0x50] sm:$0xff] %vm201, 0.0
          %229 = vst.msk [vmem:[#allocation3 + $0x58] sm:$0xff] %vm201, 0.0
          %230 = vst.msk [vmem:[#allocation3 + $0x60] sm:$0xff] %vm201, 0.0
          %231 = vst.msk [vmem:[#allocation3 + $0x68] sm:$0xff] %vm201, 0.0
          %232 = vst.msk [vmem:[#allocation3 + $0x70] sm:$0xff] %vm201, 0.0
          %233 = vst.msk [vmem:[#allocation3 + $0x78] sm:$0xff] %vm201, 0.0
          %vm234 = vcmask 261120
          %235 = vst.msk [vmem:[#allocation4] sm:$0xff] %vm234, 0.0
          %236 = vst.msk [vmem:[#allocation4 + $0x8] sm:$0xff] %vm234, 0.0
          %237 = vst.msk [vmem:[#allocation4 + $0x10] sm:$0xff] %vm234, 0.0
          %238 = vst.msk [vmem:[#allocation4 + $0x18] sm:$0xff] %vm234, 0.0
          %239 = vst.msk [vmem:[#allocation4 + $0x20] sm:$0xff] %vm234, 0.0
          %240 = vst.msk [vmem:[#allocation4 + $0x28] sm:$0xff] %vm234, 0.0
          %241 = vst.msk [vmem:[#allocation4 + $0x30] sm:$0xff] %vm234, 0.0
          %242 = vst.msk [vmem:[#allocation4 + $0x38] sm:$0xff] %vm234, 0.0
          %243 = vst.msk [vmem:[#allocation4 + $0x40] sm:$0xff] %vm234, 0.0
          %244 = vst.msk [vmem:[#allocation4 + $0x48] sm:$0xff] %vm234, 0.0
          %245 = vst.msk [vmem:[#allocation4 + $0x50] sm:$0xff] %vm234, 0.0
          %246 = vst.msk [vmem:[#allocation4 + $0x58] sm:$0xff] %vm234, 0.0
          %247 = vst.msk [vmem:[#allocation4 + $0x60] sm:$0xff] %vm234, 0.0
          %248 = vst.msk [vmem:[#allocation4 + $0x68] sm:$0xff] %vm234, 0.0
          %249 = vst.msk [vmem:[#allocation4 + $0x70] sm:$0xff] %vm234, 0.0
          %250 = vst.msk [vmem:[#allocation4 + $0x78] sm:$0xff] %vm234, 0.0
        $region36: #{tpu_custom_call.1} parent=31 // pred_fallthru
          _
        %v251 = vld [vmem:[%s195] sm:$0xff]
        %v252 = vld [vmem:[%s1] sm:$0xff]
        %v253 = vld [vmem:[%s1 + $0x8] sm:$0xff]
        %v254 = vld [vmem:[%s1 + $0x10] sm:$0xff]
        %v255 = vld [vmem:[%s1 + $0x18] sm:$0xff]
        %v256 = vld [vmem:[%s1 + $0x20] sm:$0xff]
        %v257 = vld [vmem:[%s1 + $0x28] sm:$0xff]
        %v258 = vld [vmem:[%s1 + $0x30] sm:$0xff]
        %v259 = vld [vmem:[%s1 + $0x38] sm:$0xff]
        %v260 = vld [vmem:[%s1 + $0x40] sm:$0xff]
        %v261 = vld [vmem:[%s1 + $0x48] sm:$0xff]
        %v262 = vld [vmem:[%s1 + $0x50] sm:$0xff]
        %v263 = vld [vmem:[%s1 + $0x58] sm:$0xff]
        %v264 = vld [vmem:[%s1 + $0x60] sm:$0xff]
        %v265 = vld [vmem:[%s1 + $0x68] sm:$0xff]
        %v266 = vld [vmem:[%s1 + $0x70] sm:$0xff]
        %v267 = vld [vmem:[%s1 + $0x78] sm:$0xff]
        %v269 = vcombine.high %v251, %v251
        %vm270 = vcmask 31744
        %v272 = vsel %vm270, %v252, 0
        %v275 = vsel %vm270, %v253, 0
        %v278 = vsel %vm270, %v254, 0
        %v281 = vsel %vm270, %v255, 0
        %v284 = vsel %vm270, %v256, 0
        %v287 = vsel %vm270, %v257, 0
        %v290 = vsel %vm270, %v258, 0
        %v293 = vsel %vm270, %v259, 0
        %v296 = vsel %vm270, %v260, 0
        %v299 = vsel %vm270, %v261, 0
        %v302 = vsel %vm270, %v262, 0
        %v305 = vsel %vm270, %v263, 0
        %v308 = vsel %vm270, %v264, 0
        %v311 = vsel %vm270, %v265, 0
        %v314 = vsel %vm270, %v266, 0
        %v317 = vsel %vm270, %v267, 0
        %vm319 = vcmask 1043456
        %v320 = vsel %vm319, %v251, 0
        %v322 = vsel %vm319, %v269, 0
        %324 = vmatprep.subr.mxu0 %v322
        %325 = vmatpush1.msra.mxu0 %v320
        %326 = vmatprep.subr.mxu0 0.0
        %327 = vmatpush1.msra.mxu0 0.0
        %328 = vmatprep.subr.mxu0 0.0
        %329 = vmatpush1.msra.mxu0 0.0
        %330 = vmatprep.subr.mxu0 0.0
        %331 = vmatpush1.msra.mxu0 0.0
        %332 = vmatprep.subr.mxu0 0.0
        %333 = vmatpush1.msra.mxu0 0.0
        %334 = vmatprep.subr.mxu0 0.0
        %335 = vmatpush1.msra.mxu0 0.0
        %336 = vmatprep.subr.mxu0 0.0
        %337 = vmatpush1.msra.mxu0 0.0
        %338 = vmatprep.subr.mxu0 0.0
        %339 = vmatpush1.msra.mxu0 0.0
        %340 = vmatprep.subr.mxu0 0.0
        %341 = vmatpush1.msra.mxu0 0.0
        %342 = vmatprep.subr.mxu0 0.0
        %343 = vmatpush1.msra.mxu0 0.0
        %344 = vmatprep.subr.mxu0 0.0
        %345 = vmatpush1.msra.mxu0 0.0
        %346 = vmatprep.subr.mxu0 0.0
        %347 = vmatpush1.msra.mxu0 0.0
        %348 = vmatprep.subr.mxu0 0.0
        %349 = vmatpush1.msra.mxu0 0.0
        %350 = vmatprep.subr.mxu0 0.0
        %351 = vmatpush1.msra.mxu0 0.0
        %352 = vmatprep.subr.mxu0 0.0
        %353 = vmatpush1.msra.mxu0 0.0
        %354 = vmatprep.subr.mxu0 0.0
        %355 = vmatpush1.msra.mxu0 0.0
        %356 = vmatprep.subr.mxu0 0.0
        %357 = vmatpush1.msra.mxu0 0.0
        %358 = vmatprep.subr.mxu0 0.0
        %359 = vmatpush1.msra.mxu0 0.0
        %360 = vmatprep.subr.mxu0 0.0
        %361 = vmatpush1.msra.mxu0 0.0
        %362 = vmatprep.subr.mxu0 0.0
        %363 = vmatpush1.msra.mxu0 0.0
        %364 = vmatprep.subr.mxu0 0.0
        %365 = vmatpush1.msra.mxu0 0.0
        %366 = vmatprep.subr.mxu0 0.0
        %367 = vmatpush1.msra.mxu0 0.0
        %368 = vmatprep.subr.mxu0 0.0
        %369 = vmatpush1.msra.mxu0 0.0
        %370 = vmatprep.subr.mxu0 0.0
        %371 = vmatpush1.msra.mxu0 0.0
        %372 = vmatprep.subr.mxu0 0.0
        %373 = vmatpush1.msra.mxu0 0.0
        %374 = vmatprep.subr.mxu0 0.0
        %375 = vmatpush1.msra.mxu0 0.0
        %376 = vmatprep.subr.mxu0 0.0
        %377 = vmatpush1.msra.mxu0 0.0
        %378 = vmatprep.subr.mxu0 0.0
        %379 = vmatpush1.msra.mxu0 0.0
        %380 = vmatprep.subr.mxu0 0.0
        %381 = vmatpush1.msra.mxu0 0.0
        %382 = vmatprep.subr.mxu0 0.0
        %383 = vmatpush1.msra.mxu0 0.0
        %384 = vmatprep.subr.mxu0 0.0
        %385 = vmatpush1.msra.mxu0 0.0
        %386 = vmatprep.subr.mxu0 0.0
        %387 = vmatpush1.msra.mxu0 0.0
        %388 = vmatprep.mubr.f32.mxu0 0.0
        %389 = vmatmul.mubr.f32.gmra.mrb[0].mxu0 %v272
        %v390 = vpop.f32.mrb[0].mxu0
        %v391 = vadd.f32 0.0, %v390
        %v392 = vpop.f32.mrb[0].mxu0
        %v393 = vadd.f32 0.0, %v392
        %394 = vmatprep.mubr.f32.mxu0 0.0
        %395 = vmatmul.mubr.f32.gmra.mrb[0].mxu0 %v275
        %v396 = vpop.f32.mrb[0].mxu0
        %v397 = vadd.f32 0.0, %v396
        %v398 = vpop.f32.mrb[0].mxu0
        %v399 = vadd.f32 0.0, %v398
        %400 = vmatprep.mubr.f32.mxu0 0.0
        %401 = vmatmul.mubr.f32.gmra.mrb[0].mxu0 %v278
        %v402 = vpop.f32.mrb[0].mxu0
        %v403 = vadd.f32 0.0, %v402
        %v404 = vpop.f32.mrb[0].mxu0
        %v405 = vadd.f32 0.0, %v404
        %406 = vmatprep.mubr.f32.mxu0 0.0
        %407 = vmatmul.mubr.f32.gmra.mrb[0].mxu0 %v281
        %v408 = vpop.f32.mrb[0].mxu0
        %v409 = vadd.f32 0.0, %v408
        %v410 = vpop.f32.mrb[0].mxu0
        %v411 = vadd.f32 0.0, %v410
        %412 = vmatprep.mubr.f32.mxu0 0.0
        %413 = vmatmul.mubr.f32.gmra.mrb[0].mxu0 %v284
        %v414 = vpop.f32.mrb[0].mxu0
        %v415 = vadd.f32 0.0, %v414
        %v416 = vpop.f32.mrb[0].mxu0
        %v417 = vadd.f32 0.0, %v416
        %418 = vmatprep.mubr.f32.mxu0 0.0
        %419 = vmatmul.mubr.f32.gmra.mrb[0].mxu0 %v287
        %v420 = vpop.f32.mrb[0].mxu0
        %v421 = vadd.f32 0.0, %v420
        %v422 = vpop.f32.mrb[0].mxu0
        %v423 = vadd.f32 0.0, %v422
        %424 = vmatprep.mubr.f32.mxu0 0.0
        %425 = vmatmul.mubr.f32.gmra.mrb[0].mxu0 %v290
        %v426 = vpop.f32.mrb[0].mxu0
        %v427 = vadd.f32 0.0, %v426
        %v428 = vpop.f32.mrb[0].mxu0
        %v429 = vadd.f32 0.0, %v428
        %430 = vmatprep.mubr.f32.mxu0 0.0
        %431 = vmatmul.mubr.f32.gmra.mrb[0].mxu0 %v293
        %v432 = vpop.f32.mrb[0].mxu0
        %v433 = vadd.f32 0.0, %v432
        %v434 = vpop.f32.mrb[0].mxu0
        %v435 = vadd.f32 0.0, %v434
        %436 = vmatprep.mubr.f32.mxu0 0.0
        %437 = vmatmul.mubr.f32.gmra.mrb[0].mxu0 %v296
        %v438 = vpop.f32.mrb[0].mxu0
        %v439 = vadd.f32 0.0, %v438
        %v440 = vpop.f32.mrb[0].mxu0
        %v441 = vadd.f32 0.0, %v440
        %442 = vmatprep.mubr.f32.mxu0 0.0
        %443 = vmatmul.mubr.f32.gmra.mrb[0].mxu0 %v299
        %v444 = vpop.f32.mrb[0].mxu0
        %v445 = vadd.f32 0.0, %v444
        %v446 = vpop.f32.mrb[0].mxu0
        %v447 = vadd.f32 0.0, %v446
        %448 = vmatprep.mubr.f32.mxu0 0.0
        %449 = vmatmul.mubr.f32.gmra.mrb[0].mxu0 %v302
        %v450 = vpop.f32.mrb[0].mxu0
        %v451 = vadd.f32 0.0, %v450
        %v452 = vpop.f32.mrb[0].mxu0
        %v453 = vadd.f32 0.0, %v452
        %454 = vmatprep.mubr.f32.mxu0 0.0
        %455 = vmatmul.mubr.f32.gmra.mrb[0].mxu0 %v305
        %v456 = vpop.f32.mrb[0].mxu0
        %v457 = vadd.f32 0.0, %v456
        %v458 = vpop.f32.mrb[0].mxu0
        %v459 = vadd.f32 0.0, %v458
        %460 = vmatprep.mubr.f32.mxu0 0.0
        %461 = vmatmul.mubr.f32.gmra.mrb[0].mxu0 %v308
        %v462 = vpop.f32.mrb[0].mxu0
        %v463 = vadd.f32 0.0, %v462
        %v464 = vpop.f32.mrb[0].mxu0
        %v465 = vadd.f32 0.0, %v464
        %466 = vmatprep.mubr.f32.mxu0 0.0
        %467 = vmatmul.mubr.f32.gmra.mrb[0].mxu0 %v311
        %v468 = vpop.f32.mrb[0].mxu0
        %v469 = vadd.f32 0.0, %v468
        %v470 = vpop.f32.mrb[0].mxu0
        %v471 = vadd.f32 0.0, %v470
        %472 = vmatprep.mubr.f32.mxu0 0.0
        %473 = vmatmul.mubr.f32.gmra.mrb[0].mxu0 %v314
        %v474 = vpop.f32.mrb[0].mxu0
        %v475 = vadd.f32 0.0, %v474
        %v476 = vpop.f32.mrb[0].mxu0
        %v477 = vadd.f32 0.0, %v476
        %478 = vmatprep.mubr.f32.mxu0 0.0
        %479 = vmatmul.mubr.f32.gmra.mrb[0].mxu0 %v317
        %v480 = vpop.f32.mrb[0].mxu0
        %v481 = vadd.f32 0.0, %v480
        %v482 = vpop.f32.mrb[0].mxu0
        %v483 = vadd.f32 0.0, %v482
        %484 = vdwg.mxu0
        %v485 = vld [vmem:[%s2] sm:$0xff]
        %v486 = vld [vmem:[%s2 + $0x8] sm:$0xff]
        %v487 = vld [vmem:[%s2 + $0x10] sm:$0xff]
        %v488 = vld [vmem:[%s2 + $0x18] sm:$0xff]
        %v489 = vld [vmem:[%s2 + $0x20] sm:$0xff]
        %v490 = vld [vmem:[%s2 + $0x28] sm:$0xff]
        %v491 = vld [vmem:[%s2 + $0x30] sm:$0xff]
        %v492 = vld [vmem:[%s2 + $0x38] sm:$0xff]
        %v493 = vld [vmem:[%s2 + $0x40] sm:$0xff]
        %v494 = vld [vmem:[%s2 + $0x48] sm:$0xff]
        %v495 = vld [vmem:[%s2 + $0x50] sm:$0xff]
        %v496 = vld [vmem:[%s2 + $0x58] sm:$0xff]
        %v497 = vld [vmem:[%s2 + $0x60] sm:$0xff]
        %v498 = vld [vmem:[%s2 + $0x68] sm:$0xff]
        %v499 = vld [vmem:[%s2 + $0x70] sm:$0xff]
        %v500 = vld [vmem:[%s2 + $0x78] sm:$0xff]
        %v502 = vsel %vm270, %v485, 0
        %v505 = vsel %vm270, %v486, 0
        %v508 = vsel %vm270, %v487, 0
        %v511 = vsel %vm270, %v488, 0
        %v514 = vsel %vm270, %v489, 0
        %v517 = vsel %vm270, %v490, 0
        %v520 = vsel %vm270, %v491, 0
        %v523 = vsel %vm270, %v492, 0
        %v526 = vsel %vm270, %v493, 0
        %v529 = vsel %vm270, %v494, 0
        %v532 = vsel %vm270, %v495, 0
        %v535 = vsel %vm270, %v496, 0
        %v538 = vsel %vm270, %v497, 0
        %v541 = vsel %vm270, %v498, 0
        %v544 = vsel %vm270, %v499, 0
        %v547 = vsel %vm270, %v500, 0
        %549 = vmatprep.subr.mxu0 %v322
        %550 = vmatpush1.msra.mxu0 %v320
        %551 = vmatprep.subr.mxu0 0.0
        %552 = vmatpush1.msra.mxu0 0.0
        %553 = vmatprep.subr.mxu0 0.0
        %554 = vmatpush1.msra.mxu0 0.0
        %555 = vmatprep.subr.mxu0 0.0
        %556 = vmatpush1.msra.mxu0 0.0
        %557 = vmatprep.subr.mxu0 0.0
        %558 = vmatpush1.msra.mxu0 0.0
        %559 = vmatprep.subr.mxu0 0.0
        %560 = vmatpush1.msra.mxu0 0.0
        %561 = vmatprep.subr.mxu0 0.0
        %562 = vmatpush1.msra.mxu0 0.0
        %563 = vmatprep.subr.mxu0 0.0
        %564 = vmatpush1.msra.mxu0 0.0
        %565 = vmatprep.subr.mxu0 0.0
        %566 = vmatpush1.msra.mxu0 0.0
        %567 = vmatprep.subr.mxu0 0.0
        %568 = vmatpush1.msra.mxu0 0.0
        %569 = vmatprep.subr.mxu0 0.0
        %570 = vmatpush1.msra.mxu0 0.0
        %571 = vmatprep.subr.mxu0 0.0
        %572 = vmatpush1.msra.mxu0 0.0
        %573 = vmatprep.subr.mxu0 0.0
        %574 = vmatpush1.msra.mxu0 0.0
        %575 = vmatprep.subr.mxu0 0.0
        %576 = vmatpush1.msra.mxu0 0.0
        %577 = vmatprep.subr.mxu0 0.0
        %578 = vmatpush1.msra.mxu0 0.0
        %579 = vmatprep.subr.mxu0 0.0
        %580 = vmatpush1.msra.mxu0 0.0
        %581 = vmatprep.subr.mxu0 0.0
        %582 = vmatpush1.msra.mxu0 0.0
        %583 = vmatprep.subr.mxu0 0.0
        %584 = vmatpush1.msra.mxu0 0.0
        %585 = vmatprep.subr.mxu0 0.0
        %586 = vmatpush1.msra.mxu0 0.0
        %587 = vmatprep.subr.mxu0 0.0
        %588 = vmatpush1.msra.mxu0 0.0
        %589 = vmatprep.subr.mxu0 0.0
        %590 = vmatpush1.msra.mxu0 0.0
        %591 = vmatprep.subr.mxu0 0.0
        %592 = vmatpush1.msra.mxu0 0.0
        %593 = vmatprep.subr.mxu0 0.0
        %594 = vmatpush1.msra.mxu0 0.0
        %595 = vmatprep.subr.mxu0 0.0
        %596 = vmatpush1.msra.mxu0 0.0
        %597 = vmatprep.subr.mxu0 0.0
        %598 = vmatpush1.msra.mxu0 0.0
        %599 = vmatprep.subr.mxu0 0.0
        %600 = vmatpush1.msra.mxu0 0.0
        %601 = vmatprep.subr.mxu0 0.0
        %602 = vmatpush1.msra.mxu0 0.0
        %603 = vmatprep.subr.mxu0 0.0
        %604 = vmatpush1.msra.mxu0 0.0
        %605 = vmatprep.subr.mxu0 0.0
        %606 = vmatpush1.msra.mxu0 0.0
        %607 = vmatprep.subr.mxu0 0.0
        %608 = vmatpush1.msra.mxu0 0.0
        %609 = vmatprep.subr.mxu0 0.0
        %610 = vmatpush1.msra.mxu0 0.0
        %611 = vmatprep.subr.mxu0 0.0
        %612 = vmatpush1.msra.mxu0 0.0
        %613 = vmatprep.mubr.f32.mxu0 0.0
        %614 = vmatmul.mubr.f32.gmra.mrb[0].mxu0 %v502
        %v615 = vpop.f32.mrb[0].mxu0
        %v616 = vadd.f32 0.0, %v615
        %v617 = vpop.f32.mrb[0].mxu0
        %v618 = vadd.f32 0.0, %v617
        %619 = vmatprep.mubr.f32.mxu0 0.0
        %620 = vmatmul.mubr.f32.gmra.mrb[0].mxu0 %v505
        %v621 = vpop.f32.mrb[0].mxu0
        %v622 = vadd.f32 0.0, %v621
        %v623 = vpop.f32.mrb[0].mxu0
        %v624 = vadd.f32 0.0, %v623
        %625 = vmatprep.mubr.f32.mxu0 0.0
        %626 = vmatmul.mubr.f32.gmra.mrb[0].mxu0 %v508
        %v627 = vpop.f32.mrb[0].mxu0
        %v628 = vadd.f32 0.0, %v627
        %v629 = vpop.f32.mrb[0].mxu0
        %v630 = vadd.f32 0.0, %v629
        %631 = vmatprep.mubr.f32.mxu0 0.0
        %632 = vmatmul.mubr.f32.gmra.mrb[0].mxu0 %v511
        %v633 = vpop.f32.mrb[0].mxu0
        %v634 = vadd.f32 0.0, %v633
        %v635 = vpop.f32.mrb[0].mxu0
        %v636 = vadd.f32 0.0, %v635
        %637 = vmatprep.mubr.f32.mxu0 0.0
        %638 = vmatmul.mubr.f32.gmra.mrb[0].mxu0 %v514
        %v639 = vpop.f32.mrb[0].mxu0
        %v640 = vadd.f32 0.0, %v639
        %v641 = vpop.f32.mrb[0].mxu0
        %v642 = vadd.f32 0.0, %v641
        %643 = vmatprep.mubr.f32.mxu0 0.0
        %644 = vmatmul.mubr.f32.gmra.mrb[0].mxu0 %v517
        %v645 = vpop.f32.mrb[0].mxu0
        %v646 = vadd.f32 0.0, %v645
        %v647 = vpop.f32.mrb[0].mxu0
        %v648 = vadd.f32 0.0, %v647
        %649 = vmatprep.mubr.f32.mxu0 0.0
        %650 = vmatmul.mubr.f32.gmra.mrb[0].mxu0 %v520
        %v651 = vpop.f32.mrb[0].mxu0
        %v652 = vadd.f32 0.0, %v651
        %v653 = vpop.f32.mrb[0].mxu0
        %v654 = vadd.f32 0.0, %v653
        %655 = vmatprep.mubr.f32.mxu0 0.0
        %656 = vmatmul.mubr.f32.gmra.mrb[0].mxu0 %v523
        %v657 = vpop.f32.mrb[0].mxu0
        %v658 = vadd.f32 0.0, %v657
        %v659 = vpop.f32.mrb[0].mxu0
        %v660 = vadd.f32 0.0, %v659
        %661 = vmatprep.mubr.f32.mxu0 0.0
        %662 = vmatmul.mubr.f32.gmra.mrb[0].mxu0 %v526
        %v663 = vpop.f32.mrb[0].mxu0
        %v664 = vadd.f32 0.0, %v663
        %v665 = vpop.f32.mrb[0].mxu0
        %v666 = vadd.f32 0.0, %v665
        %667 = vmatprep.mubr.f32.mxu0 0.0
        %668 = vmatmul.mubr.f32.gmra.mrb[0].mxu0 %v529
        %v669 = vpop.f32.mrb[0].mxu0
        %v670 = vadd.f32 0.0, %v669
        %v671 = vpop.f32.mrb[0].mxu0
        %v672 = vadd.f32 0.0, %v671
        %673 = vmatprep.mubr.f32.mxu0 0.0
        %674 = vmatmul.mubr.f32.gmra.mrb[0].mxu0 %v532
        %v675 = vpop.f32.mrb[0].mxu0
        %v676 = vadd.f32 0.0, %v675
        %v677 = vpop.f32.mrb[0].mxu0
        %v678 = vadd.f32 0.0, %v677
        %679 = vmatprep.mubr.f32.mxu0 0.0
        %680 = vmatmul.mubr.f32.gmra.mrb[0].mxu0 %v535
        %v681 = vpop.f32.mrb[0].mxu0
        %v682 = vadd.f32 0.0, %v681
        %v683 = vpop.f32.mrb[0].mxu0
        %v684 = vadd.f32 0.0, %v683
        %685 = vmatprep.mubr.f32.mxu0 0.0
        %686 = vmatmul.mubr.f32.gmra.mrb[0].mxu0 %v538
        %v687 = vpop.f32.mrb[0].mxu0
        %v688 = vadd.f32 0.0, %v687
        %v689 = vpop.f32.mrb[0].mxu0
        %v690 = vadd.f32 0.0, %v689
        %691 = vmatprep.mubr.f32.mxu0 0.0
        %692 = vmatmul.mubr.f32.gmra.mrb[0].mxu0 %v541
        %v693 = vpop.f32.mrb[0].mxu0
        %v694 = vadd.f32 0.0, %v693
        %v695 = vpop.f32.mrb[0].mxu0
        %v696 = vadd.f32 0.0, %v695
        %697 = vmatprep.mubr.f32.mxu0 0.0
        %698 = vmatmul.mubr.f32.gmra.mrb[0].mxu0 %v544
        %v699 = vpop.f32.mrb[0].mxu0
        %v700 = vadd.f32 0.0, %v699
        %v701 = vpop.f32.mrb[0].mxu0
        %v702 = vadd.f32 0.0, %v701
        %703 = vmatprep.mubr.f32.mxu0 0.0
        %704 = vmatmul.mubr.f32.gmra.mrb[0].mxu0 %v547
        %v705 = vpop.f32.mrb[0].mxu0
        %v706 = vadd.f32 0.0, %v705
        %v707 = vpop.f32.mrb[0].mxu0
        %v708 = vadd.f32 0.0, %v707
        %709 = vdwg.mxu0
        %v710 = vld [vmem:[#allocation2] sm:$0xff]
        %v711 = vld [vmem:[#allocation2 + $0x8] sm:$0xff]
        %v712 = vld [vmem:[#allocation2 + $0x10] sm:$0xff]
        %v713 = vld [vmem:[#allocation2 + $0x18] sm:$0xff]
        %v714 = vld [vmem:[#allocation2 + $0x20] sm:$0xff]
        %v715 = vld [vmem:[#allocation2 + $0x28] sm:$0xff]
        %v716 = vld [vmem:[#allocation2 + $0x30] sm:$0xff]
        %v717 = vld [vmem:[#allocation2 + $0x38] sm:$0xff]
        %v718 = vld [vmem:[#allocation2 + $0x40] sm:$0xff]
        %v719 = vld [vmem:[#allocation2 + $0x48] sm:$0xff]
        %v720 = vld [vmem:[#allocation2 + $0x50] sm:$0xff]
        %v721 = vld [vmem:[#allocation2 + $0x58] sm:$0xff]
        %v722 = vld [vmem:[#allocation2 + $0x60] sm:$0xff]
        %v723 = vld [vmem:[#allocation2 + $0x68] sm:$0xff]
        %v724 = vld [vmem:[#allocation2 + $0x70] sm:$0xff]
        %v725 = vld [vmem:[#allocation2 + $0x78] sm:$0xff]
        %v726 = vmax.f32 %v391, %v393
        %727 = vmax.xlane.f32.xlu0 %v726
        %v728 = vpop.xlane.xlu0 %727
        %v729 = vmax.f32 %v397, %v399
        %730 = vmax.xlane.f32.xlu0 %v729
        %v731 = vpop.xlane.xlu0 %730
        %v732 = vmax.f32 %v403, %v405
        %733 = vmax.xlane.f32.xlu0 %v732
        %v734 = vpop.xlane.xlu0 %733
        %v735 = vmax.f32 %v409, %v411
        %736 = vmax.xlane.f32.xlu0 %v735
        %v737 = vpop.xlane.xlu0 %736
        %v738 = vmax.f32 %v415, %v417
        %739 = vmax.xlane.f32.xlu0 %v738
        %v740 = vpop.xlane.xlu0 %739
        %v741 = vmax.f32 %v421, %v423
        %742 = vmax.xlane.f32.xlu0 %v741
        %v743 = vpop.xlane.xlu0 %742
        %v744 = vmax.f32 %v427, %v429
        %745 = vmax.xlane.f32.xlu0 %v744
        %v746 = vpop.xlane.xlu0 %745
        %v747 = vmax.f32 %v433, %v435
        %748 = vmax.xlane.f32.xlu0 %v747
        %v749 = vpop.xlane.xlu0 %748
        %v750 = vmax.f32 %v439, %v441
        %751 = vmax.xlane.f32.xlu0 %v750
        %v752 = vpop.xlane.xlu0 %751
        %v753 = vmax.f32 %v445, %v447
        %754 = vmax.xlane.f32.xlu0 %v753
        %v755 = vpop.xlane.xlu0 %754
        %v756 = vmax.f32 %v451, %v453
        %757 = vmax.xlane.f32.xlu0 %v756
        %v758 = vpop.xlane.xlu0 %757
        %v759 = vmax.f32 %v457, %v459
        %760 = vmax.xlane.f32.xlu0 %v759
        %v761 = vpop.xlane.xlu0 %760
        %v762 = vmax.f32 %v463, %v465
        %763 = vmax.xlane.f32.xlu0 %v762
        %v764 = vpop.xlane.xlu0 %763
        %v765 = vmax.f32 %v469, %v471
        %766 = vmax.xlane.f32.xlu0 %v765
        %v767 = vpop.xlane.xlu0 %766
        %v768 = vmax.f32 %v475, %v477
        %769 = vmax.xlane.f32.xlu0 %v768
        %v770 = vpop.xlane.xlu0 %769
        %v771 = vmax.f32 %v481, %v483
        %772 = vmax.xlane.f32.xlu0 %v771
        %v773 = vpop.xlane.xlu0 %772
        %v774 = vmax.f32 %v710, %v728
        %v775 = vmax.f32 %v711, %v731
        %v776 = vmax.f32 %v712, %v734
        %v777 = vmax.f32 %v713, %v737
        %v778 = vmax.f32 %v714, %v740
        %v779 = vmax.f32 %v715, %v743
        %v780 = vmax.f32 %v716, %v746
        %v781 = vmax.f32 %v717, %v749
        %v782 = vmax.f32 %v718, %v752
        %v783 = vmax.f32 %v719, %v755
        %v784 = vmax.f32 %v720, %v758
        %v785 = vmax.f32 %v721, %v761
        %v786 = vmax.f32 %v722, %v764
        %v787 = vmax.f32 %v723, %v767
        %v788 = vmax.f32 %v724, %v770
        %v789 = vmax.f32 %v725, %v773
        %v790 = vsub.f32 %v710, %v774
        %v791 = vsub.f32 %v711, %v775
        %v792 = vsub.f32 %v712, %v776
        %v793 = vsub.f32 %v713, %v777
        %v794 = vsub.f32 %v714, %v778
        %v795 = vsub.f32 %v715, %v779
        %v796 = vsub.f32 %v716, %v780
        %v797 = vsub.f32 %v717, %v781
        %v798 = vsub.f32 %v718, %v782
        %v799 = vsub.f32 %v719, %v783
        %v800 = vsub.f32 %v720, %v784
        %v801 = vsub.f32 %v721, %v785
        %v802 = vsub.f32 %v722, %v786
        %v803 = vsub.f32 %v723, %v787
        %v804 = vsub.f32 %v724, %v788
        %v805 = vsub.f32 %v725, %v789
        %v806 = vmul.f32 %v790, 1.442695
        %v807 = vpow.pop %v806
        %v808 = vmul.f32 %v791, 1.442695
        %v809 = vpow.pop %v808
        %v810 = vmul.f32 %v792, 1.442695
        %v811 = vpow.pop %v810
        %v812 = vmul.f32 %v793, 1.442695
        %v813 = vpow.pop %v812
        %v814 = vmul.f32 %v794, 1.442695
        %v815 = vpow.pop %v814
        %v816 = vmul.f32 %v795, 1.442695
        %v817 = vpow.pop %v816
        %v818 = vmul.f32 %v796, 1.442695
        %v819 = vpow.pop %v818
        %v820 = vmul.f32 %v797, 1.442695
        %v821 = vpow.pop %v820
        %v822 = vmul.f32 %v798, 1.442695
        %v823 = vpow.pop %v822
        %v824 = vmul.f32 %v799, 1.442695
        %v825 = vpow.pop %v824
        %v826 = vmul.f32 %v800, 1.442695
        %v827 = vpow.pop %v826
        %v828 = vmul.f32 %v801, 1.442695
        %v829 = vpow.pop %v828
        %v830 = vmul.f32 %v802, 1.442695
        %v831 = vpow.pop %v830
        %v832 = vmul.f32 %v803, 1.442695
        %v833 = vpow.pop %v832
        %v834 = vmul.f32 %v804, 1.442695
        %v835 = vpow.pop %v834
        %v836 = vmul.f32 %v805, 1.442695
        %v837 = vpow.pop %v836
        %839 = vset.pattern.permute.xlu0 0
        %840 = vperm.xlu0 %839, %v774
        %v841 = vpop.permute.xlu0 %840
        %844 = vset.pattern.permute.xlu0 0
        %845 = vperm.xlu0 %844, %v775
        %v846 = vpop.permute.xlu0 %845
        %849 = vset.pattern.permute.xlu0 0
        %850 = vperm.xlu0 %849, %v776
        %v851 = vpop.permute.xlu0 %850
        %854 = vset.pattern.permute.xlu0 0
        %855 = vperm.xlu0 %854, %v777
        %v856 = vpop.permute.xlu0 %855
        %859 = vset.pattern.permute.xlu0 0
        %860 = vperm.xlu0 %859, %v778
        %v861 = vpop.permute.xlu0 %860
        %864 = vset.pattern.permute.xlu0 0
        %865 = vperm.xlu0 %864, %v779
        %v866 = vpop.permute.xlu0 %865
        %869 = vset.pattern.permute.xlu0 0
        %870 = vperm.xlu0 %869, %v780
        %v871 = vpop.permute.xlu0 %870
        %874 = vset.pattern.permute.xlu0 0
        %875 = vperm.xlu0 %874, %v781
        %v876 = vpop.permute.xlu0 %875
        %879 = vset.pattern.permute.xlu0 0
        %880 = vperm.xlu0 %879, %v782
        %v881 = vpop.permute.xlu0 %880
        %884 = vset.pattern.permute.xlu0 0
        %885 = vperm.xlu0 %884, %v783
        %v886 = vpop.permute.xlu0 %885
        %889 = vset.pattern.permute.xlu0 0
        %890 = vperm.xlu0 %889, %v784
        %v891 = vpop.permute.xlu0 %890
        %894 = vset.pattern.permute.xlu0 0
        %895 = vperm.xlu0 %894, %v785
        %v896 = vpop.permute.xlu0 %895
        %899 = vset.pattern.permute.xlu0 0
        %900 = vperm.xlu0 %899, %v786
        %v901 = vpop.permute.xlu0 %900
        %904 = vset.pattern.permute.xlu0 0
        %905 = vperm.xlu0 %904, %v787
        %v906 = vpop.permute.xlu0 %905
        %909 = vset.pattern.permute.xlu0 0
        %910 = vperm.xlu0 %909, %v788
        %v911 = vpop.permute.xlu0 %910
        %914 = vset.pattern.permute.xlu0 0
        %915 = vperm.xlu0 %914, %v789
        %v916 = vpop.permute.xlu0 %915
        %v918 = vsub.f32 %v391, %v841
        %v919 = vsub.f32 %v393, %v841
        %v920 = vsub.f32 %v397, %v846
        %v921 = vsub.f32 %v399, %v846
        %v922 = vsub.f32 %v403, %v851
        %v923 = vsub.f32 %v405, %v851
        %v924 = vsub.f32 %v409, %v856
        %v925 = vsub.f32 %v411, %v856
        %v926 = vsub.f32 %v415, %v861
        %v927 = vsub.f32 %v417, %v861
        %v928 = vsub.f32 %v421, %v866
        %v929 = vsub.f32 %v423, %v866
        %v930 = vsub.f32 %v427, %v871
        %v931 = vsub.f32 %v429, %v871
        %v932 = vsub.f32 %v433, %v876
        %v933 = vsub.f32 %v435, %v876
        %v934 = vsub.f32 %v439, %v881
        %v935 = vsub.f32 %v441, %v881
        %v936 = vsub.f32 %v445, %v886
        %v937 = vsub.f32 %v447, %v886
        %v938 = vsub.f32 %v451, %v891
        %v939 = vsub.f32 %v453, %v891
        %v940 = vsub.f32 %v457, %v896
        %v941 = vsub.f32 %v459, %v896
        %v942 = vsub.f32 %v463, %v901
        %v943 = vsub.f32 %v465, %v901
        %v944 = vsub.f32 %v469, %v906
        %v945 = vsub.f32 %v471, %v906
        %v946 = vsub.f32 %v475, %v911
        %v947 = vsub.f32 %v477, %v911
        %v948 = vsub.f32 %v481, %v916
        %v949 = vsub.f32 %v483, %v916
        %v950 = vmul.f32 %v918, 1.442695
        %v951 = vpow.pop %v950
        %v952 = vmul.f32 %v919, 1.442695
        %v953 = vpow.pop %v952
        %v954 = vmul.f32 %v920, 1.442695
        %v955 = vpow.pop %v954
        %v956 = vmul.f32 %v921, 1.442695
        %v957 = vpow.pop %v956
        %v958 = vmul.f32 %v922, 1.442695
        %v959 = vpow.pop %v958
        %v960 = vmul.f32 %v923, 1.442695
        %v961 = vpow.pop %v960
        %v962 = vmul.f32 %v924, 1.442695
        %v963 = vpow.pop %v962
        %v964 = vmul.f32 %v925, 1.442695
        %v965 = vpow.pop %v964
        %v966 = vmul.f32 %v926, 1.442695
        %v967 = vpow.pop %v966
        %v968 = vmul.f32 %v927, 1.442695
        %v969 = vpow.pop %v968
        %v970 = vmul.f32 %v928, 1.442695
        %v971 = vpow.pop %v970
        %v972 = vmul.f32 %v929, 1.442695
        %v973 = vpow.pop %v972
        %v974 = vmul.f32 %v930, 1.442695
        %v975 = vpow.pop %v974
        %v976 = vmul.f32 %v931, 1.442695
        %v977 = vpow.pop %v976
        %v978 = vmul.f32 %v932, 1.442695
        %v979 = vpow.pop %v978
        %v980 = vmul.f32 %v933, 1.442695
        %v981 = vpow.pop %v980
        %v982 = vmul.f32 %v934, 1.442695
        %v983 = vpow.pop %v982
        %v984 = vmul.f32 %v935, 1.442695
        %v985 = vpow.pop %v984
        %v986 = vmul.f32 %v936, 1.442695
        %v987 = vpow.pop %v986
        %v988 = vmul.f32 %v937, 1.442695
        %v989 = vpow.pop %v988
        %v990 = vmul.f32 %v938, 1.442695
        %v991 = vpow.pop %v990
        %v992 = vmul.f32 %v939, 1.442695
        %v993 = vpow.pop %v992
        %v994 = vmul.f32 %v940, 1.442695
        %v995 = vpow.pop %v994
        %v996 = vmul.f32 %v941, 1.442695
        %v997 = vpow.pop %v996
        %v998 = vmul.f32 %v942, 1.442695
        %v999 = vpow.pop %v998
        %v1000 = vmul.f32 %v943, 1.442695
        %v1001 = vpow.pop %v1000
        %v1002 = vmul.f32 %v944, 1.442695
        %v1003 = vpow.pop %v1002
        %v1004 = vmul.f32 %v945, 1.442695
        %v1005 = vpow.pop %v1004
        %v1006 = vmul.f32 %v946, 1.442695
        %v1007 = vpow.pop %v1006
        %v1008 = vmul.f32 %v947, 1.442695
        %v1009 = vpow.pop %v1008
        %v1010 = vmul.f32 %v948, 1.442695
        %v1011 = vpow.pop %v1010
        %v1012 = vmul.f32 %v949, 1.442695
        %v1013 = vpow.pop %v1012
        %v1014 = vld [vmem:[#allocation3] sm:$0xff]
        %v1015 = vld [vmem:[#allocation3 + $0x8] sm:$0xff]
        %v1016 = vld [vmem:[#allocation3 + $0x10] sm:$0xff]
        %v1017 = vld [vmem:[#allocation3 + $0x18] sm:$0xff]
        %v1018 = vld [vmem:[#allocation3 + $0x20] sm:$0xff]
        %v1019 = vld [vmem:[#allocation3 + $0x28] sm:$0xff]
        %v1020 = vld [vmem:[#allocation3 + $0x30] sm:$0xff]
        %v1021 = vld [vmem:[#allocation3 + $0x38] sm:$0xff]
        %v1022 = vld [vmem:[#allocation3 + $0x40] sm:$0xff]
        %v1023 = vld [vmem:[#allocation3 + $0x48] sm:$0xff]
        %v1024 = vld [vmem:[#allocation3 + $0x50] sm:$0xff]
        %v1025 = vld [vmem:[#allocation3 + $0x58] sm:$0xff]
        %v1026 = vld [vmem:[#allocation3 + $0x60] sm:$0xff]
        %v1027 = vld [vmem:[#allocation3 + $0x68] sm:$0xff]
        %v1028 = vld [vmem:[#allocation3 + $0x70] sm:$0xff]
        %v1029 = vld [vmem:[#allocation3 + $0x78] sm:$0xff]
        %v1030 = vmul.f32 %v807, %v1014
        %v1031 = vmul.f32 %v809, %v1015
        %v1032 = vmul.f32 %v811, %v1016
        %v1033 = vmul.f32 %v813, %v1017
        %v1034 = vmul.f32 %v815, %v1018
        %v1035 = vmul.f32 %v817, %v1019
        %v1036 = vmul.f32 %v819, %v1020
        %v1037 = vmul.f32 %v821, %v1021
        %v1038 = vmul.f32 %v823, %v1022
        %v1039 = vmul.f32 %v825, %v1023
        %v1040 = vmul.f32 %v827, %v1024
        %v1041 = vmul.f32 %v829, %v1025
        %v1042 = vmul.f32 %v831, %v1026
        %v1043 = vmul.f32 %v833, %v1027
        %v1044 = vmul.f32 %v835, %v1028
        %v1045 = vmul.f32 %v837, %v1029
        %v1046 = vadd.f32 %v951, %v953
        %1047 = vadd.xlane.f32.xlu0 %v1046
        %v1048 = vpop.xlane.xlu0 %1047
        %v1049 = vadd.f32 %v955, %v957
        %1050 = vadd.xlane.f32.xlu0 %v1049
        %v1051 = vpop.xlane.xlu0 %1050
        %v1052 = vadd.f32 %v959, %v961
        %1053 = vadd.xlane.f32.xlu0 %v1052
        %v1054 = vpop.xlane.xlu0 %1053
        %v1055 = vadd.f32 %v963, %v965
        %1056 = vadd.xlane.f32.xlu0 %v1055
        %v1057 = vpop.xlane.xlu0 %1056
        %v1058 = vadd.f32 %v967, %v969
        %1059 = vadd.xlane.f32.xlu0 %v1058
        %v1060 = vpop.xlane.xlu0 %1059
        %v1061 = vadd.f32 %v971, %v973
        %1062 = vadd.xlane.f32.xlu0 %v1061
        %v1063 = vpop.xlane.xlu0 %1062
        %v1064 = vadd.f32 %v975, %v977
        %1065 = vadd.xlane.f32.xlu0 %v1064
        %v1066 = vpop.xlane.xlu0 %1065
        %v1067 = vadd.f32 %v979, %v981
        %1068 = vadd.xlane.f32.xlu0 %v1067
        %v1069 = vpop.xlane.xlu0 %1068
        %v1070 = vadd.f32 %v983, %v985
        %1071 = vadd.xlane.f32.xlu0 %v1070
        %v1072 = vpop.xlane.xlu0 %1071
        %v1073 = vadd.f32 %v987, %v989
        %1074 = vadd.xlane.f32.xlu0 %v1073
        %v1075 = vpop.xlane.xlu0 %1074
        %v1076 = vadd.f32 %v991, %v993
        %1077 = vadd.xlane.f32.xlu0 %v1076
        %v1078 = vpop.xlane.xlu0 %1077
        %v1079 = vadd.f32 %v995, %v997
        %1080 = vadd.xlane.f32.xlu0 %v1079
        %v1081 = vpop.xlane.xlu0 %1080
        %v1082 = vadd.f32 %v999, %v1001
        %1083 = vadd.xlane.f32.xlu0 %v1082
        %v1084 = vpop.xlane.xlu0 %1083
        %v1085 = vadd.f32 %v1003, %v1005
        %1086 = vadd.xlane.f32.xlu0 %v1085
        %v1087 = vpop.xlane.xlu0 %1086
        %v1088 = vadd.f32 %v1007, %v1009
        %1089 = vadd.xlane.f32.xlu0 %v1088
        %v1090 = vpop.xlane.xlu0 %1089
        %v1091 = vadd.f32 %v1011, %v1013
        %1092 = vadd.xlane.f32.xlu0 %v1091
        %v1093 = vpop.xlane.xlu0 %1092
        %v1094 = vadd.f32 %v1030, %v1048
        %v1095 = vadd.f32 %v1031, %v1051
        %v1096 = vadd.f32 %v1032, %v1054
        %v1097 = vadd.f32 %v1033, %v1057
        %v1098 = vadd.f32 %v1034, %v1060
        %v1099 = vadd.f32 %v1035, %v1063
        %v1100 = vadd.f32 %v1036, %v1066
        %v1101 = vadd.f32 %v1037, %v1069
        %v1102 = vadd.f32 %v1038, %v1072
        %v1103 = vadd.f32 %v1039, %v1075
        %v1104 = vadd.f32 %v1040, %v1078
        %v1105 = vadd.f32 %v1041, %v1081
        %v1106 = vadd.f32 %v1042, %v1084
        %v1107 = vadd.f32 %v1043, %v1087
        %v1108 = vadd.f32 %v1044, %v1090
        %v1109 = vadd.f32 %v1045, %v1093
        %vm1110 = vcmask 7168
        %1111 = vst.msk [vmem:[#allocation3] sm:$0xff] %vm1110, %v1094
        %1112 = vst.msk [vmem:[#allocation3 + $0x8] sm:$0xff] %vm1110, %v1095
        %1113 = vst.msk [vmem:[#allocation3 + $0x10] sm:$0xff] %vm1110, %v1096
        %1114 = vst.msk [vmem:[#allocation3 + $0x18] sm:$0xff] %vm1110, %v1097
        %1115 = vst.msk [vmem:[#allocation3 + $0x20] sm:$0xff] %vm1110, %v1098
        %1116 = vst.msk [vmem:[#allocation3 + $0x28] sm:$0xff] %vm1110, %v1099
        %1117 = vst.msk [vmem:[#allocation3 + $0x30] sm:$0xff] %vm1110, %v1100
        %1118 = vst.msk [vmem:[#allocation3 + $0x38] sm:$0xff] %vm1110, %v1101
        %1119 = vst.msk [vmem:[#allocation3 + $0x40] sm:$0xff] %vm1110, %v1102
        %1120 = vst.msk [vmem:[#allocation3 + $0x48] sm:$0xff] %vm1110, %v1103
        %1121 = vst.msk [vmem:[#allocation3 + $0x50] sm:$0xff] %vm1110, %v1104
        %1122 = vst.msk [vmem:[#allocation3 + $0x58] sm:$0xff] %vm1110, %v1105
        %1123 = vst.msk [vmem:[#allocation3 + $0x60] sm:$0xff] %vm1110, %v1106
        %1124 = vst.msk [vmem:[#allocation3 + $0x68] sm:$0xff] %vm1110, %v1107
        %1125 = vst.msk [vmem:[#allocation3 + $0x70] sm:$0xff] %vm1110, %v1108
        %1126 = vst.msk [vmem:[#allocation3 + $0x78] sm:$0xff] %vm1110, %v1109
        %1127 = vst.msk [vmem:[#allocation2] sm:$0xff] %vm1110, %v774
        %1128 = vst.msk [vmem:[#allocation2 + $0x8] sm:$0xff] %vm1110, %v775
        %1129 = vst.msk [vmem:[#allocation2 + $0x10] sm:$0xff] %vm1110, %v776
        %1130 = vst.msk [vmem:[#allocation2 + $0x18] sm:$0xff] %vm1110, %v777
        %1131 = vst.msk [vmem:[#allocation2 + $0x20] sm:$0xff] %vm1110, %v778
        %1132 = vst.msk [vmem:[#allocation2 + $0x28] sm:$0xff] %vm1110, %v779
        %1133 = vst.msk [vmem:[#allocation2 + $0x30] sm:$0xff] %vm1110, %v780
        %1134 = vst.msk [vmem:[#allocation2 + $0x38] sm:$0xff] %vm1110, %v781
        %1135 = vst.msk [vmem:[#allocation2 + $0x40] sm:$0xff] %vm1110, %v782
        %1136 = vst.msk [vmem:[#allocation2 + $0x48] sm:$0xff] %vm1110, %v783
        %1137 = vst.msk [vmem:[#allocation2 + $0x50] sm:$0xff] %vm1110, %v784
        %1138 = vst.msk [vmem:[#allocation2 + $0x58] sm:$0xff] %vm1110, %v785
        %1139 = vst.msk [vmem:[#allocation2 + $0x60] sm:$0xff] %vm1110, %v786
        %1140 = vst.msk [vmem:[#allocation2 + $0x68] sm:$0xff] %vm1110, %v787
        %1141 = vst.msk [vmem:[#allocation2 + $0x70] sm:$0xff] %vm1110, %v788
        %1142 = vst.msk [vmem:[#allocation2 + $0x78] sm:$0xff] %vm1110, %v789
        %1143 = vmatprep.subr.mxu0 %v618
        %1144 = vmatpush1.xpose.msra.mxu0 %v616
        %1145 = vmatprep.subr.mxu0 %v624
        %1146 = vmatpush1.xpose.msra.mxu0 %v622
        %1147 = vmatprep.subr.mxu0 %v630
        %1148 = vmatpush1.xpose.msra.mxu0 %v628
        %1149 = vmatprep.subr.mxu0 %v636
        %1150 = vmatpush1.xpose.msra.mxu0 %v634
        %1151 = vmatprep.subr.mxu0 0.0
        %1152 = vmatpush1.xpose.msra.mxu0 0.0
        %1153 = vmatprep.subr.mxu0 0.0
        %1154 = vmatpush1.xpose.msra.mxu0 0.0
        %1155 = vmatprep.subr.mxu0 0.0
        %1156 = vmatpush1.xpose.msra.mxu0 0.0
        %1157 = vmatprep.subr.mxu0 0.0
        %1158 = vmatpush1.xpose.msra.mxu0 0.0
        %1159 = vmatprep.subr.mxu0 0.0
        %1160 = vmatpush1.xpose.msra.mxu0 0.0
        %1161 = vmatprep.subr.mxu0 0.0
        %1162 = vmatpush1.xpose.msra.mxu0 0.0
        %1163 = vmatprep.subr.mxu0 0.0
        %1164 = vmatpush1.xpose.msra.mxu0 0.0
        %1165 = vmatprep.subr.mxu0 0.0
        %1166 = vmatpush1.xpose.msra.mxu0 0.0
        %1167 = vmatprep.subr.mxu0 0.0
        %1168 = vmatpush1.xpose.msra.mxu0 0.0
        %1169 = vmatprep.subr.mxu0 0.0
        %1170 = vmatpush1.xpose.msra.mxu0 0.0
        %1171 = vmatprep.subr.mxu0 0.0
        %1172 = vmatpush1.xpose.msra.mxu0 0.0
        %1173 = vmatprep.subr.mxu0 0.0
        %1174 = vmatpush1.xpose.msra.mxu0 0.0
        %1175 = vmatprep.subr.mxu0 0.0
        %1176 = vmatpush1.xpose.msra.mxu0 0.0
        %1177 = vmatprep.subr.mxu0 0.0
        %1178 = vmatpush1.xpose.msra.mxu0 0.0
        %1179 = vmatprep.subr.mxu0 0.0
        %1180 = vmatpush1.xpose.msra.mxu0 0.0
        %1181 = vmatprep.subr.mxu0 0.0
        %1182 = vmatpush1.xpose.msra.mxu0 0.0
        %1183 = vmatprep.subr.mxu0 0.0
        %1184 = vmatpush1.xpose.msra.mxu0 0.0
        %1185 = vmatprep.subr.mxu0 0.0
        %1186 = vmatpush1.xpose.msra.mxu0 0.0
        %1187 = vmatprep.subr.mxu0 0.0
        %1188 = vmatpush1.xpose.msra.mxu0 0.0
        %1189 = vmatprep.subr.mxu0 0.0
        %1190 = vmatpush1.xpose.msra.mxu0 0.0
        %1191 = vmatprep.subr.mxu0 0.0
        %1192 = vmatpush1.xpose.msra.mxu0 0.0
        %1193 = vmatprep.subr.mxu0 0.0
        %1194 = vmatpush1.xpose.msra.mxu0 0.0
        %1195 = vmatprep.subr.mxu0 0.0
        %1196 = vmatpush1.xpose.msra.mxu0 0.0
        %1197 = vmatprep.subr.mxu0 0.0
        %1198 = vmatpush1.xpose.msra.mxu0 0.0
        %1199 = vmatprep.subr.mxu0 0.0
        %1200 = vmatpush1.xpose.msra.mxu0 0.0
        %1201 = vmatprep.subr.mxu0 0.0
        %1202 = vmatpush1.xpose.msra.mxu0 0.0
        %1203 = vmatprep.subr.mxu0 0.0
        %1204 = vmatpush1.xpose.msra.mxu0 0.0
        %1205 = vmatprep.subr.mxu0 0.0
        %1206 = vmatpush1.xpose.msra.mxu0 0.0
        %1207 = vmatprep.mubr.f32.mxu0 %v953
        %1208 = vmatmul.mubr.f32.gmra.mrb[0].mxu0 %v951
        %v1209 = vpop.f32.mrb[0].mxu0
        %v1210 = vadd.f32 0.0, %v1209
        %v1211 = vpop.f32.mrb[0].mxu0
        %1212 = vmatprep.mubr.f32.mxu0 %v957
        %1213 = vmatmul.mubr.f32.gmra.mrb[0].mxu0 %v955
        %v1214 = vpop.f32.mrb[0].mxu0
        %v1215 = vadd.f32 0.0, %v1214
        %v1216 = vpop.f32.mrb[0].mxu0
        %1217 = vmatprep.mubr.f32.mxu0 %v961
        %1218 = vmatmul.mubr.f32.gmra.mrb[0].mxu0 %v959
        %v1219 = vpop.f32.mrb[0].mxu0
        %v1220 = vadd.f32 0.0, %v1219
        %v1221 = vpop.f32.mrb[0].mxu0
        %1222 = vmatprep.mubr.f32.mxu0 %v965
        %1223 = vmatmul.mubr.f32.gmra.mrb[0].mxu0 %v963
        %v1224 = vpop.f32.mrb[0].mxu0
        %v1225 = vadd.f32 0.0, %v1224
        %v1226 = vpop.f32.mrb[0].mxu0
        %1227 = vdwg.mxu0
        %1228 = vmatprep.subr.mxu0 %v642
        %1229 = vmatpush1.xpose.msra.mxu0 %v640
        %1230 = vmatprep.subr.mxu0 %v648
        %1231 = vmatpush1.xpose.msra.mxu0 %v646
        %1232 = vmatprep.subr.mxu0 %v654
        %1233 = vmatpush1.xpose.msra.mxu0 %v652
        %1234 = vmatprep.subr.mxu0 %v660
        %1235 = vmatpush1.xpose.msra.mxu0 %v658
        %1236 = vmatprep.subr.mxu0 0.0
        %1237 = vmatpush1.xpose.msra.mxu0 0.0
        %1238 = vmatprep.subr.mxu0 0.0
        %1239 = vmatpush1.xpose.msra.mxu0 0.0
        %1240 = vmatprep.subr.mxu0 0.0
        %1241 = vmatpush1.xpose.msra.mxu0 0.0
        %1242 = vmatprep.subr.mxu0 0.0
        %1243 = vmatpush1.xpose.msra.mxu0 0.0
        %1244 = vmatprep.subr.mxu0 0.0
        %1245 = vmatpush1.xpose.msra.mxu0 0.0
        %1246 = vmatprep.subr.mxu0 0.0
        %1247 = vmatpush1.xpose.msra.mxu0 0.0
        %1248 = vmatprep.subr.mxu0 0.0
        %1249 = vmatpush1.xpose.msra.mxu0 0.0
        %1250 = vmatprep.subr.mxu0 0.0
        %1251 = vmatpush1.xpose.msra.mxu0 0.0
        %1252 = vmatprep.subr.mxu0 0.0
        %1253 = vmatpush1.xpose.msra.mxu0 0.0
        %1254 = vmatprep.subr.mxu0 0.0
        %1255 = vmatpush1.xpose.msra.mxu0 0.0
        %1256 = vmatprep.subr.mxu0 0.0
        %1257 = vmatpush1.xpose.msra.mxu0 0.0
        %1258 = vmatprep.subr.mxu0 0.0
        %1259 = vmatpush1.xpose.msra.mxu0 0.0
        %1260 = vmatprep.subr.mxu0 0.0
        %1261 = vmatpush1.xpose.msra.mxu0 0.0
        %1262 = vmatprep.subr.mxu0 0.0
        %1263 = vmatpush1.xpose.msra.mxu0 0.0
        %1264 = vmatprep.subr.mxu0 0.0
        %1265 = vmatpush1.xpose.msra.mxu0 0.0
        %1266 = vmatprep.subr.mxu0 0.0
        %1267 = vmatpush1.xpose.msra.mxu0 0.0
        %1268 = vmatprep.subr.mxu0 0.0
        %1269 = vmatpush1.xpose.msra.mxu0 0.0
        %1270 = vmatprep.subr.mxu0 0.0
        %1271 = vmatpush1.xpose.msra.mxu0 0.0
        %1272 = vmatprep.subr.mxu0 0.0
        %1273 = vmatpush1.xpose.msra.mxu0 0.0
        %1274 = vmatprep.subr.mxu0 0.0
        %1275 = vmatpush1.xpose.msra.mxu0 0.0
        %1276 = vmatprep.subr.mxu0 0.0
        %1277 = vmatpush1.xpose.msra.mxu0 0.0
        %1278 = vmatprep.subr.mxu0 0.0
        %1279 = vmatpush1.xpose.msra.mxu0 0.0
        %1280 = vmatprep.subr.mxu0 0.0
        %1281 = vmatpush1.xpose.msra.mxu0 0.0
        %1282 = vmatprep.subr.mxu0 0.0
        %1283 = vmatpush1.xpose.msra.mxu0 0.0
        %1284 = vmatprep.subr.mxu0 0.0
        %1285 = vmatpush1.xpose.msra.mxu0 0.0
        %1286 = vmatprep.subr.mxu0 0.0
        %1287 = vmatpush1.xpose.msra.mxu0 0.0
        %1288 = vmatprep.subr.mxu0 0.0
        %1289 = vmatpush1.xpose.msra.mxu0 0.0
        %1290 = vmatprep.subr.mxu0 0.0
        %1291 = vmatpush1.xpose.msra.mxu0 0.0
        %1292 = vmatprep.mubr.f32.mxu0 %v969
        %1293 = vmatmul.mubr.f32.gmra.mrb[0].mxu0 %v967
        %v1294 = vpop.f32.mrb[0].mxu0
        %v1295 = vadd.f32 0.0, %v1294
        %v1296 = vpop.f32.mrb[0].mxu0
        %1297 = vmatprep.mubr.f32.mxu0 %v973
        %1298 = vmatmul.mubr.f32.gmra.mrb[0].mxu0 %v971
        %v1299 = vpop.f32.mrb[0].mxu0
        %v1300 = vadd.f32 0.0, %v1299
        %v1301 = vpop.f32.mrb[0].mxu0
        %1302 = vmatprep.mubr.f32.mxu0 %v977
        %1303 = vmatmul.mubr.f32.gmra.mrb[0].mxu0 %v975
        %v1304 = vpop.f32.mrb[0].mxu0
        %v1305 = vadd.f32 0.0, %v1304
        %v1306 = vpop.f32.mrb[0].mxu0
        %1307 = vmatprep.mubr.f32.mxu0 %v981
        %1308 = vmatmul.mubr.f32.gmra.mrb[0].mxu0 %v979
        %v1309 = vpop.f32.mrb[0].mxu0
        %v1310 = vadd.f32 0.0, %v1309
        %v1311 = vpop.f32.mrb[0].mxu0
        %1312 = vdwg.mxu0
        %1313 = vmatprep.subr.mxu0 %v666
        %1314 = vmatpush1.xpose.msra.mxu0 %v664
        %1315 = vmatprep.subr.mxu0 %v672
        %1316 = vmatpush1.xpose.msra.mxu0 %v670
        %1317 = vmatprep.subr.mxu0 %v678
        %1318 = vmatpush1.xpose.msra.mxu0 %v676
        %1319 = vmatprep.subr.mxu0 %v684
        %1320 = vmatpush1.xpose.msra.mxu0 %v682
        %1321 = vmatprep.subr.mxu0 0.0
        %1322 = vmatpush1.xpose.msra.mxu0 0.0
        %1323 = vmatprep.subr.mxu0 0.0
        %1324 = vmatpush1.xpose.msra.mxu0 0.0
        %1325 = vmatprep.subr.mxu0 0.0
        %1326 = vmatpush1.xpose.msra.mxu0 0.0
        %1327 = vmatprep.subr.mxu0 0.0
        %1328 = vmatpush1.xpose.msra.mxu0 0.0
        %1329 = vmatprep.subr.mxu0 0.0
        %1330 = vmatpush1.xpose.msra.mxu0 0.0
        %1331 = vmatprep.subr.mxu0 0.0
        %1332 = vmatpush1.xpose.msra.mxu0 0.0
        %1333 = vmatprep.subr.mxu0 0.0
        %1334 = vmatpush1.xpose.msra.mxu0 0.0
        %1335 = vmatprep.subr.mxu0 0.0
        %1336 = vmatpush1.xpose.msra.mxu0 0.0
        %1337 = vmatprep.subr.mxu0 0.0
        %1338 = vmatpush1.xpose.msra.mxu0 0.0
        %1339 = vmatprep.subr.mxu0 0.0
        %1340 = vmatpush1.xpose.msra.mxu0 0.0
        %1341 = vmatprep.subr.mxu0 0.0
        %1342 = vmatpush1.xpose.msra.mxu0 0.0
        %1343 = vmatprep.subr.mxu0 0.0
        %1344 = vmatpush1.xpose.msra.mxu0 0.0
        %1345 = vmatprep.subr.mxu0 0.0
        %1346 = vmatpush1.xpose.msra.mxu0 0.0
        %1347 = vmatprep.subr.mxu0 0.0
        %1348 = vmatpush1.xpose.msra.mxu0 0.0
        %1349 = vmatprep.subr.mxu0 0.0
        %1350 = vmatpush1.xpose.msra.mxu0 0.0
        %1351 = vmatprep.subr.mxu0 0.0
        %1352 = vmatpush1.xpose.msra.mxu0 0.0
        %1353 = vmatprep.subr.mxu0 0.0
        %1354 = vmatpush1.xpose.msra.mxu0 0.0
        %1355 = vmatprep.subr.mxu0 0.0
        %1356 = vmatpush1.xpose.msra.mxu0 0.0
        %1357 = vmatprep.subr.mxu0 0.0
        %1358 = vmatpush1.xpose.msra.mxu0 0.0
        %1359 = vmatprep.subr.mxu0 0.0
        %1360 = vmatpush1.xpose.msra.mxu0 0.0
        %1361 = vmatprep.subr.mxu0 0.0
        %1362 = vmatpush1.xpose.msra.mxu0 0.0
        %1363 = vmatprep.subr.mxu0 0.0
        %1364 = vmatpush1.xpose.msra.mxu0 0.0
        %1365 = vmatprep.subr.mxu0 0.0
        %1366 = vmatpush1.xpose.msra.mxu0 0.0
        %1367 = vmatprep.subr.mxu0 0.0
        %1368 = vmatpush1.xpose.msra.mxu0 0.0
        %1369 = vmatprep.subr.mxu0 0.0
        %1370 = vmatpush1.xpose.msra.mxu0 0.0
        %1371 = vmatprep.subr.mxu0 0.0
        %1372 = vmatpush1.xpose.msra.mxu0 0.0
        %1373 = vmatprep.subr.mxu0 0.0
        %1374 = vmatpush1.xpose.msra.mxu0 0.0
        %1375 = vmatprep.subr.mxu0 0.0
        %1376 = vmatpush1.xpose.msra.mxu0 0.0
        %1377 = vmatprep.mubr.f32.mxu0 %v985
        %1378 = vmatmul.mubr.f32.gmra.mrb[0].mxu0 %v983
        %v1379 = vpop.f32.mrb[0].mxu0
        %v1380 = vadd.f32 0.0, %v1379
        %v1381 = vpop.f32.mrb[0].mxu0
        %1382 = vmatprep.mubr.f32.mxu0 %v989
        %1383 = vmatmul.mubr.f32.gmra.mrb[0].mxu0 %v987
        %v1384 = vpop.f32.mrb[0].mxu0
        %v1385 = vadd.f32 0.0, %v1384
        %v1386 = vpop.f32.mrb[0].mxu0
        %1387 = vmatprep.mubr.f32.mxu0 %v993
        %1388 = vmatmul.mubr.f32.gmra.mrb[0].mxu0 %v991
        %v1389 = vpop.f32.mrb[0].mxu0
        %v1390 = vadd.f32 0.0, %v1389
        %v1391 = vpop.f32.mrb[0].mxu0
        %1392 = vmatprep.mubr.f32.mxu0 %v997
        %1393 = vmatmul.mubr.f32.gmra.mrb[0].mxu0 %v995
        %v1394 = vpop.f32.mrb[0].mxu0
        %v1395 = vadd.f32 0.0, %v1394
        %v1396 = vpop.f32.mrb[0].mxu0
        %1397 = vdwg.mxu0
        %1398 = vmatprep.subr.mxu0 %v690
        %1399 = vmatpush1.xpose.msra.mxu0 %v688
        %1400 = vmatprep.subr.mxu0 %v696
        %1401 = vmatpush1.xpose.msra.mxu0 %v694
        %1402 = vmatprep.subr.mxu0 %v702
        %1403 = vmatpush1.xpose.msra.mxu0 %v700
        %1404 = vmatprep.subr.mxu0 %v708
        %1405 = vmatpush1.xpose.msra.mxu0 %v706
        %1406 = vmatprep.subr.mxu0 0.0
        %1407 = vmatpush1.xpose.msra.mxu0 0.0
        %1408 = vmatprep.subr.mxu0 0.0
        %1409 = vmatpush1.xpose.msra.mxu0 0.0
        %1410 = vmatprep.subr.mxu0 0.0
        %1411 = vmatpush1.xpose.msra.mxu0 0.0
        %1412 = vmatprep.subr.mxu0 0.0
        %1413 = vmatpush1.xpose.msra.mxu0 0.0
        %1414 = vmatprep.subr.mxu0 0.0
        %1415 = vmatpush1.xpose.msra.mxu0 0.0
        %1416 = vmatprep.subr.mxu0 0.0
        %1417 = vmatpush1.xpose.msra.mxu0 0.0
        %1418 = vmatprep.subr.mxu0 0.0
        %1419 = vmatpush1.xpose.msra.mxu0 0.0
        %1420 = vmatprep.subr.mxu0 0.0
        %1421 = vmatpush1.xpose.msra.mxu0 0.0
        %1422 = vmatprep.subr.mxu0 0.0
        %1423 = vmatpush1.xpose.msra.mxu0 0.0
        %1424 = vmatprep.subr.mxu0 0.0
        %1425 = vmatpush1.xpose.msra.mxu0 0.0
        %1426 = vmatprep.subr.mxu0 0.0
        %1427 = vmatpush1.xpose.msra.mxu0 0.0
        %1428 = vmatprep.subr.mxu0 0.0
        %1429 = vmatpush1.xpose.msra.mxu0 0.0
        %1430 = vmatprep.subr.mxu0 0.0
        %1431 = vmatpush1.xpose.msra.mxu0 0.0
        %1432 = vmatprep.subr.mxu0 0.0
        %1433 = vmatpush1.xpose.msra.mxu0 0.0
        %1434 = vmatprep.subr.mxu0 0.0
        %1435 = vmatpush1.xpose.msra.mxu0 0.0
        %1436 = vmatprep.subr.mxu0 0.0
        %1437 = vmatpush1.xpose.msra.mxu0 0.0
        %1438 = vmatprep.subr.mxu0 0.0
        %1439 = vmatpush1.xpose.msra.mxu0 0.0
        %1440 = vmatprep.subr.mxu0 0.0
        %1441 = vmatpush1.xpose.msra.mxu0 0.0
        %1442 = vmatprep.subr.mxu0 0.0
        %1443 = vmatpush1.xpose.msra.mxu0 0.0
        %1444 = vmatprep.subr.mxu0 0.0
        %1445 = vmatpush1.xpose.msra.mxu0 0.0
        %1446 = vmatprep.subr.mxu0 0.0
        %1447 = vmatpush1.xpose.msra.mxu0 0.0
        %1448 = vmatprep.subr.mxu0 0.0
        %1449 = vmatpush1.xpose.msra.mxu0 0.0
        %1450 = vmatprep.subr.mxu0 0.0
        %1451 = vmatpush1.xpose.msra.mxu0 0.0
        %1452 = vmatprep.subr.mxu0 0.0
        %1453 = vmatpush1.xpose.msra.mxu0 0.0
        %1454 = vmatprep.subr.mxu0 0.0
        %1455 = vmatpush1.xpose.msra.mxu0 0.0
        %1456 = vmatprep.subr.mxu0 0.0
        %1457 = vmatpush1.xpose.msra.mxu0 0.0
        %1458 = vmatprep.subr.mxu0 0.0
        %1459 = vmatpush1.xpose.msra.mxu0 0.0
        %1460 = vmatprep.subr.mxu0 0.0
        %1461 = vmatpush1.xpose.msra.mxu0 0.0
        %1462 = vmatprep.mubr.f32.mxu0 %v1001
        %1463 = vmatmul.mubr.f32.gmra.mrb[0].mxu0 %v999
        %v1464 = vpop.f32.mrb[0].mxu0
        %v1465 = vadd.f32 0.0, %v1464
        %v1466 = vpop.f32.mrb[0].mxu0
        %1467 = vmatprep.mubr.f32.mxu0 %v1005
        %1468 = vmatmul.mubr.f32.gmra.mrb[0].mxu0 %v1003
        %v1469 = vpop.f32.mrb[0].mxu0
        %v1470 = vadd.f32 0.0, %v1469
        %v1471 = vpop.f32.mrb[0].mxu0
        %1472 = vmatprep.mubr.f32.mxu0 %v1009
        %1473 = vmatmul.mubr.f32.gmra.mrb[0].mxu0 %v1007
        %v1474 = vpop.f32.mrb[0].mxu0
        %v1475 = vadd.f32 0.0, %v1474
        %v1476 = vpop.f32.mrb[0].mxu0
        %1477 = vmatprep.mubr.f32.mxu0 %v1013
        %1478 = vmatmul.mubr.f32.gmra.mrb[0].mxu0 %v1011
        %v1479 = vpop.f32.mrb[0].mxu0
        %v1480 = vadd.f32 0.0, %v1479
        %v1481 = vpop.f32.mrb[0].mxu0
        %1482 = vdwg.mxu0
        %v1483 = vld [vmem:[#allocation4] sm:$0xff]
        %v1484 = vld [vmem:[#allocation4 + $0x8] sm:$0xff]
        %v1485 = vld [vmem:[#allocation4 + $0x10] sm:$0xff]
        %v1486 = vld [vmem:[#allocation4 + $0x18] sm:$0xff]
        %v1487 = vld [vmem:[#allocation4 + $0x20] sm:$0xff]
        %v1488 = vld [vmem:[#allocation4 + $0x28] sm:$0xff]
        %v1489 = vld [vmem:[#allocation4 + $0x30] sm:$0xff]
        %v1490 = vld [vmem:[#allocation4 + $0x38] sm:$0xff]
        %v1491 = vld [vmem:[#allocation4 + $0x40] sm:$0xff]
        %v1492 = vld [vmem:[#allocation4 + $0x48] sm:$0xff]
        %v1493 = vld [vmem:[#allocation4 + $0x50] sm:$0xff]
        %v1494 = vld [vmem:[#allocation4 + $0x58] sm:$0xff]
        %v1495 = vld [vmem:[#allocation4 + $0x60] sm:$0xff]
        %v1496 = vld [vmem:[#allocation4 + $0x68] sm:$0xff]
        %v1497 = vld [vmem:[#allocation4 + $0x70] sm:$0xff]
        %v1498 = vld [vmem:[#allocation4 + $0x78] sm:$0xff]
        %1500 = vset.pattern.permute.xlu0 0
        %1501 = vperm.xlu0 %1500, %v807
        %v1502 = vpop.permute.xlu0 %1501
        %1505 = vset.pattern.permute.xlu0 0
        %1506 = vperm.xlu0 %1505, %v809
        %v1507 = vpop.permute.xlu0 %1506
        %1510 = vset.pattern.permute.xlu0 0
        %1511 = vperm.xlu0 %1510, %v811
        %v1512 = vpop.permute.xlu0 %1511
        %1515 = vset.pattern.permute.xlu0 0
        %1516 = vperm.xlu0 %1515, %v813
        %v1517 = vpop.permute.xlu0 %1516
        %1520 = vset.pattern.permute.xlu0 0
        %1521 = vperm.xlu0 %1520, %v815
        %v1522 = vpop.permute.xlu0 %1521
        %1525 = vset.pattern.permute.xlu0 0
        %1526 = vperm.xlu0 %1525, %v817
        %v1527 = vpop.permute.xlu0 %1526
        %1530 = vset.pattern.permute.xlu0 0
        %1531 = vperm.xlu0 %1530, %v819
        %v1532 = vpop.permute.xlu0 %1531
        %1535 = vset.pattern.permute.xlu0 0
        %1536 = vperm.xlu0 %1535, %v821
        %v1537 = vpop.permute.xlu0 %1536
        %1540 = vset.pattern.permute.xlu0 0
        %1541 = vperm.xlu0 %1540, %v823
        %v1542 = vpop.permute.xlu0 %1541
        %1545 = vset.pattern.permute.xlu0 0
        %1546 = vperm.xlu0 %1545, %v825
        %v1547 = vpop.permute.xlu0 %1546
        %1550 = vset.pattern.permute.xlu0 0
        %1551 = vperm.xlu0 %1550, %v827
        %v1552 = vpop.permute.xlu0 %1551
        %1555 = vset.pattern.permute.xlu0 0
        %1556 = vperm.xlu0 %1555, %v829
        %v1557 = vpop.permute.xlu0 %1556
        %1560 = vset.pattern.permute.xlu0 0
        %1561 = vperm.xlu0 %1560, %v831
        %v1562 = vpop.permute.xlu0 %1561
        %1565 = vset.pattern.permute.xlu0 0
        %1566 = vperm.xlu0 %1565, %v833
        %v1567 = vpop.permute.xlu0 %1566
        %1570 = vset.pattern.permute.xlu0 0
        %1571 = vperm.xlu0 %1570, %v835
        %v1572 = vpop.permute.xlu0 %1571
        %1575 = vset.pattern.permute.xlu0 0
        %1576 = vperm.xlu0 %1575, %v837
        %v1577 = vpop.permute.xlu0 %1576
        %v1579 = vmul.f32 %v1502, %v1483
        %v1580 = vmul.f32 %v1507, %v1484
        %v1581 = vmul.f32 %v1512, %v1485
        %v1582 = vmul.f32 %v1517, %v1486
        %v1583 = vmul.f32 %v1522, %v1487
        %v1584 = vmul.f32 %v1527, %v1488
        %v1585 = vmul.f32 %v1532, %v1489
        %v1586 = vmul.f32 %v1537, %v1490
        %v1587 = vmul.f32 %v1542, %v1491
        %v1588 = vmul.f32 %v1547, %v1492
        %v1589 = vmul.f32 %v1552, %v1493
        %v1590 = vmul.f32 %v1557, %v1494
        %v1591 = vmul.f32 %v1562, %v1495
        %v1592 = vmul.f32 %v1567, %v1496
        %v1593 = vmul.f32 %v1572, %v1497
        %v1594 = vmul.f32 %v1577, %v1498
        %v1595 = vadd.f32 %v1579, %v1210
        %v1596 = vadd.f32 %v1580, %v1215
        %v1597 = vadd.f32 %v1581, %v1220
        %v1598 = vadd.f32 %v1582, %v1225
        %v1599 = vadd.f32 %v1583, %v1295
        %v1600 = vadd.f32 %v1584, %v1300
        %v1601 = vadd.f32 %v1585, %v1305
        %v1602 = vadd.f32 %v1586, %v1310
        %v1603 = vadd.f32 %v1587, %v1380
        %v1604 = vadd.f32 %v1588, %v1385
        %v1605 = vadd.f32 %v1589, %v1390
        %v1606 = vadd.f32 %v1590, %v1395
        %v1607 = vadd.f32 %v1591, %v1465
        %v1608 = vadd.f32 %v1592, %v1470
        %v1609 = vadd.f32 %v1593, %v1475
        %v1610 = vadd.f32 %v1594, %v1480
        %vm1611 = vcmask 261120
        %1612 = vst.msk [vmem:[#allocation4] sm:$0xff] %vm1611, %v1595
        %1613 = vst.msk [vmem:[#allocation4 + $0x8] sm:$0xff] %vm1611, %v1596
        %1614 = vst.msk [vmem:[#allocation4 + $0x10] sm:$0xff] %vm1611, %v1597
        %1615 = vst.msk [vmem:[#allocation4 + $0x18] sm:$0xff] %vm1611, %v1598
        %1616 = vst.msk [vmem:[#allocation4 + $0x20] sm:$0xff] %vm1611, %v1599
        %1617 = vst.msk [vmem:[#allocation4 + $0x28] sm:$0xff] %vm1611, %v1600
        %1618 = vst.msk [vmem:[#allocation4 + $0x30] sm:$0xff] %vm1611, %v1601
        %1619 = vst.msk [vmem:[#allocation4 + $0x38] sm:$0xff] %vm1611, %v1602
        %1620 = vst.msk [vmem:[#allocation4 + $0x40] sm:$0xff] %vm1611, %v1603
        %1621 = vst.msk [vmem:[#allocation4 + $0x48] sm:$0xff] %vm1611, %v1604
        %1622 = vst.msk [vmem:[#allocation4 + $0x50] sm:$0xff] %vm1611, %v1605
        %1623 = vst.msk [vmem:[#allocation4 + $0x58] sm:$0xff] %vm1611, %v1606
        %1624 = vst.msk [vmem:[#allocation4 + $0x60] sm:$0xff] %vm1611, %v1607
        %1625 = vst.msk [vmem:[#allocation4 + $0x68] sm:$0xff] %vm1611, %v1608
        %1626 = vst.msk [vmem:[#allocation4 + $0x70] sm:$0xff] %vm1611, %v1609
        %1627 = vst.msk [vmem:[#allocation4 + $0x78] sm:$0xff] %vm1611, %v1610
        // Predicated region
        $region37: #{tpu_custom_call.1} parent=31 // pred_check
          %p1628 = pneg %p197
        $region38: #{tpu_custom_call.1} parent=31 // pred_check_branch
          %1630 = sbr.rel (%p1628) target = $region40
        $region39: #{tpu_custom_call.1} parent=31 // pred_region
          %v1631 = vld [vmem:[#allocation3] sm:$0xff]
          %v1632 = vld [vmem:[#allocation3 + $0x8] sm:$0xff]
          %v1633 = vld [vmem:[#allocation3 + $0x10] sm:$0xff]
          %v1634 = vld [vmem:[#allocation3 + $0x18] sm:$0xff]
          %v1635 = vld [vmem:[#allocation3 + $0x20] sm:$0xff]
          %v1636 = vld [vmem:[#allocation3 + $0x28] sm:$0xff]
          %v1637 = vld [vmem:[#allocation3 + $0x30] sm:$0xff]
          %v1638 = vld [vmem:[#allocation3 + $0x38] sm:$0xff]
          %v1639 = vld [vmem:[#allocation3 + $0x40] sm:$0xff]
          %v1640 = vld [vmem:[#allocation3 + $0x48] sm:$0xff]
          %v1641 = vld [vmem:[#allocation3 + $0x50] sm:$0xff]
          %v1642 = vld [vmem:[#allocation3 + $0x58] sm:$0xff]
          %v1643 = vld [vmem:[#allocation3 + $0x60] sm:$0xff]
          %v1644 = vld [vmem:[#allocation3 + $0x68] sm:$0xff]
          %v1645 = vld [vmem:[#allocation3 + $0x70] sm:$0xff]
          %v1646 = vld [vmem:[#allocation3 + $0x78] sm:$0xff]
          %v1647 = vrcp.pop %v1631
          %v1648 = vmul.f32 0.17677669, %v1647
          %v1649 = vrcp.pop %v1632
          %v1650 = vmul.f32 0.17677669, %v1649
          %v1651 = vrcp.pop %v1633
          %v1652 = vmul.f32 0.17677669, %v1651
          %v1653 = vrcp.pop %v1634
          %v1654 = vmul.f32 0.17677669, %v1653
          %v1655 = vrcp.pop %v1635
          %v1656 = vmul.f32 0.17677669, %v1655
          %v1657 = vrcp.pop %v1636
          %v1658 = vmul.f32 0.17677669, %v1657
          %v1659 = vrcp.pop %v1637
          %v1660 = vmul.f32 0.17677669, %v1659
          %v1661 = vrcp.pop %v1638
          %v1662 = vmul.f32 0.17677669, %v1661
          %v1663 = vrcp.pop %v1639
          %v1664 = vmul.f32 0.17677669, %v1663
          %v1665 = vrcp.pop %v1640
          %v1666 = vmul.f32 0.17677669, %v1665
          %v1667 = vrcp.pop %v1641
          %v1668 = vmul.f32 0.17677669, %v1667
          %v1669 = vrcp.pop %v1642
          %v1670 = vmul.f32 0.17677669, %v1669
          %v1671 = vrcp.pop %v1643
          %v1672 = vmul.f32 0.17677669, %v1671
          %v1673 = vrcp.pop %v1644
          %v1674 = vmul.f32 0.17677669, %v1673
          %v1675 = vrcp.pop %v1645
          %v1676 = vmul.f32 0.17677669, %v1675
          %v1677 = vrcp.pop %v1646
          %v1678 = vmul.f32 0.17677669, %v1677
          %v1679 = vld [vmem:[#allocation4] sm:$0xff]
          %v1680 = vld [vmem:[#allocation4 + $0x8] sm:$0xff]
          %v1681 = vld [vmem:[#allocation4 + $0x10] sm:$0xff]
          %v1682 = vld [vmem:[#allocation4 + $0x18] sm:$0xff]
          %v1683 = vld [vmem:[#allocation4 + $0x20] sm:$0xff]
          %v1684 = vld [vmem:[#allocation4 + $0x28] sm:$0xff]
          %v1685 = vld [vmem:[#allocation4 + $0x30] sm:$0xff]
          %v1686 = vld [vmem:[#allocation4 + $0x38] sm:$0xff]
          %v1687 = vld [vmem:[#allocation4 + $0x40] sm:$0xff]
          %v1688 = vld [vmem:[#allocation4 + $0x48] sm:$0xff]
          %v1689 = vld [vmem:[#allocation4 + $0x50] sm:$0xff]
          %v1690 = vld [vmem:[#allocation4 + $0x58] sm:$0xff]
          %v1691 = vld [vmem:[#allocation4 + $0x60] sm:$0xff]
          %v1692 = vld [vmem:[#allocation4 + $0x68] sm:$0xff]
          %v1693 = vld [vmem:[#allocation4 + $0x70] sm:$0xff]
          %v1694 = vld [vmem:[#allocation4 + $0x78] sm:$0xff]
          %1696 = vset.pattern.permute.xlu0 0
          %1697 = vperm.xlu0 %1696, %v1648
          %v1698 = vpop.permute.xlu0 %1697
          %1701 = vset.pattern.permute.xlu0 0
          %1702 = vperm.xlu0 %1701, %v1650
          %v1703 = vpop.permute.xlu0 %1702
          %1706 = vset.pattern.permute.xlu0 0
          %1707 = vperm.xlu0 %1706, %v1652
          %v1708 = vpop.permute.xlu0 %1707
          %1711 = vset.pattern.permute.xlu0 0
          %1712 = vperm.xlu0 %1711, %v1654
          %v1713 = vpop.permute.xlu0 %1712
          %1716 = vset.pattern.permute.xlu0 0
          %1717 = vperm.xlu0 %1716, %v1656
          %v1718 = vpop.permute.xlu0 %1717
          %1721 = vset.pattern.permute.xlu0 0
          %1722 = vperm.xlu0 %1721, %v1658
          %v1723 = vpop.permute.xlu0 %1722
          %1726 = vset.pattern.permute.xlu0 0
          %1727 = vperm.xlu0 %1726, %v1660
          %v1728 = vpop.permute.xlu0 %1727
          %1731 = vset.pattern.permute.xlu0 0
          %1732 = vperm.xlu0 %1731, %v1662
          %v1733 = vpop.permute.xlu0 %1732
          %1736 = vset.pattern.permute.xlu0 0
          %1737 = vperm.xlu0 %1736, %v1664
          %v1738 = vpop.permute.xlu0 %1737
          %1741 = vset.pattern.permute.xlu0 0
          %1742 = vperm.xlu0 %1741, %v1666
          %v1743 = vpop.permute.xlu0 %1742
          %1746 = vset.pattern.permute.xlu0 0
          %1747 = vperm.xlu0 %1746, %v1668
          %v1748 = vpop.permute.xlu0 %1747
          %1751 = vset.pattern.permute.xlu0 0
          %1752 = vperm.xlu0 %1751, %v1670
          %v1753 = vpop.permute.xlu0 %1752
          %1756 = vset.pattern.permute.xlu0 0
          %1757 = vperm.xlu0 %1756, %v1672
          %v1758 = vpop.permute.xlu0 %1757
          %1761 = vset.pattern.permute.xlu0 0
          %1762 = vperm.xlu0 %1761, %v1674
          %v1763 = vpop.permute.xlu0 %1762
          %1766 = vset.pattern.permute.xlu0 0
          %1767 = vperm.xlu0 %1766, %v1676
          %v1768 = vpop.permute.xlu0 %1767
          %1771 = vset.pattern.permute.xlu0 0
          %1772 = vperm.xlu0 %1771, %v1678
          %v1773 = vpop.permute.xlu0 %1772
          %v1775 = vmul.f32 %v1679, %v1698
          %v1776 = vmul.f32 %v1680, %v1703
          %v1777 = vmul.f32 %v1681, %v1708
          %v1778 = vmul.f32 %v1682, %v1713
          %v1779 = vmul.f32 %v1683, %v1718
          %v1780 = vmul.f32 %v1684, %v1723
          %v1781 = vmul.f32 %v1685, %v1728
          %v1782 = vmul.f32 %v1686, %v1733
          %v1783 = vmul.f32 %v1687, %v1738
          %v1784 = vmul.f32 %v1688, %v1743
          %v1785 = vmul.f32 %v1689, %v1748
          %v1786 = vmul.f32 %v1690, %v1753
          %v1787 = vmul.f32 %v1691, %v1758
          %v1788 = vmul.f32 %v1692, %v1763
          %v1789 = vmul.f32 %v1693, %v1768
          %v1790 = vmul.f32 %v1694, %v1773
          %1791 = vst.msk [vmem:[%s186] sm:$0xff] %vm1611, %v1775
          %1792 = vst.msk [vmem:[%s186 + $0x8] sm:$0xff] %vm1611, %v1776
          %1793 = vst.msk [vmem:[%s186 + $0x10] sm:$0xff] %vm1611, %v1777
          %1794 = vst.msk [vmem:[%s186 + $0x18] sm:$0xff] %vm1611, %v1778
          %1795 = vst.msk [vmem:[%s186 + $0x20] sm:$0xff] %vm1611, %v1779
          %1796 = vst.msk [vmem:[%s186 + $0x28] sm:$0xff] %vm1611, %v1780
          %1797 = vst.msk [vmem:[%s186 + $0x30] sm:$0xff] %vm1611, %v1781
          %1798 = vst.msk [vmem:[%s186 + $0x38] sm:$0xff] %vm1611, %v1782
          %1799 = vst.msk [vmem:[%s186 + $0x40] sm:$0xff] %vm1611, %v1783
          %1800 = vst.msk [vmem:[%s186 + $0x48] sm:$0xff] %vm1611, %v1784
          %1801 = vst.msk [vmem:[%s186 + $0x50] sm:$0xff] %vm1611, %v1785
          %1802 = vst.msk [vmem:[%s186 + $0x58] sm:$0xff] %vm1611, %v1786
          %1803 = vst.msk [vmem:[%s186 + $0x60] sm:$0xff] %vm1611, %v1787
          %1804 = vst.msk [vmem:[%s186 + $0x68] sm:$0xff] %vm1611, %v1788
          %1805 = vst.msk [vmem:[%s186 + $0x70] sm:$0xff] %vm1611, %v1789
          %1806 = vst.msk [vmem:[%s186 + $0x78] sm:$0xff] %vm1611, %v1790
        $region40: #{tpu_custom_call.1} parent=31 // pred_fallthru
          _
        %s1807 = sand.u32 %s107, 1
        %s1808 = scalar_lea.sflag [#allocation6], %s1807
        %s1809 = sand.u32 %s107, 1
        %s1810 = smul.addr %s1809, 128
        %s1811 = scalar_lea.vmem [#allocation5], %s1810
        // Predicated region
        $region41: #{tpu_custom_call.1} parent=31 // pred_check
          %p1812 = pneg %p117
        $region42: #{tpu_custom_call.1} parent=31 // pred_check_branch
          %1814 = sbr.rel (%p1812) target = $region44
        $region43: #{tpu_custom_call.1} parent=31 // pred_region
          %s1816 = ssub.s32 2048, 2048
          %1817 = vsyncadd %s1808, %s1816
          %s1818 = smul.addr %s21, 16
          %s1819 = smul.addr %s1818, 128
          %s1820 = scalar_lea.hbm %s3, %s1819
          %s1821 = sshll.u32 %s1811, 4
          %s1822 = int_to_ptr.vmem [resolvable:$true] %s1821
          %1827 = dma.vmem_to_hbm [thread:$0]  %s1822, 2048, %s1820, %s1808, 128, 128, 8
        $region44: #{tpu_custom_call.1} parent=31 // pred_fallthru
          _
      $region32: #{tpu_custom_call.1} parent=5 // pred_fallthru
        _
      %p1828 = scmp.le.s32.totalorder 2, %s12
      // Predicated region
      $region45: #{tpu_custom_call.1} parent=5 // pred_check
        %p1829 = pneg %p1828
      $region46: #{tpu_custom_call.1} parent=5 // pred_check_branch
        %1831 = sbr.rel (%p1829) target = $region48
      $region47: #{tpu_custom_call.1} parent=5 // pred_region
        %s1832 = ssub.s32 %s12, 2
        // Predicated region
        $region49: #{tpu_custom_call.1} parent=47 // pred_check
          %p1833 = pneg %p123
        $region50: #{tpu_custom_call.1} parent=47 // pred_check_branch
          %1835 = sbr.rel (%p1833) target = $region52
        $region51: #{tpu_custom_call.1} parent=47 // pred_region
          %s1836 = sand.u32 %s108, 1
          %s1837 = scalar_lea.sflag [#allocation6], %s1836
          %s1838 = sand.u32 %s108, 1
          %s1839 = smul.addr %s1838, 128
          %s1840 = scalar_lea.vmem [#allocation5], %s1839
          %1841 = dma.done %s1837, 2048
        $region52: #{tpu_custom_call.1} parent=47 // pred_fallthru
          _
      $region48: #{tpu_custom_call.1} parent=5 // pred_fallthru
        _
    $region6: #{tpu_custom_call.1} parent=1 // loop_footer
      %s16 = sadd.s32 1, %s12
    $region7: #{tpu_custom_call.1} parent=1 // loop_footer_branch
      %11 = sbr.rel target = $region3
    $region8: #{tpu_custom_call.1} parent=1 // loop_exit
      _
    %1842 = vsyncpa [#allocation6], 1
    %s1843 = scalar_lea.sflag [#allocation6], 1
    %1844 = vsyncpa %s1843, 1

</llo_original>
